<compile_context>
chip_gen: v7x
topology: tpu7x:2x2x1
jax: 0.10.0
libtpu: 0.0.40
codegen_flags: <defaults>
</compile_context>

<pallas_src>
import functools

import jax
import jax.numpy as jnp
from jax.experimental import pallas as pl
from jax.experimental.pallas import tpu as pltpu


# --------------------------------------------------------------------------
# Small helpers (all static / trace-time Python).
# --------------------------------------------------------------------------
def _round_up(x, m):
    return ((x + m - 1) // m) * m


def _pad2d(x, rows, cols):
    return jnp.pad(x, ((0, rows - x.shape[0]), (0, cols - x.shape[1])))


def _pick_tile(n, target):
    """Largest multiple of 128 that divides n and is <= min(target, n)."""
    t = max(128, (min(target, n) // 128) * 128)
    while n % t:
        t -= 128
    return t


def _vmem_budget_bytes():
    # ~25% headroom on the detected chip, capped at 64 MiB so the same plan is
    # safe on v7x (64 MiB VMEM -> 48 MiB budget) even if detection fails.
    try:
        cap = int(pltpu.get_tpu_info().vmem_capacity_bytes)
    except Exception:  # query unavailable -> assume the tightest generation
        cap = 64 * 1024 * 1024
    return min((cap * 3) // 4, 64 * 1024 * 1024)


def _fused_vmem_bytes(Np, Fp, Hp, tm, tk):
    """Rough VMEM footprint of the fused (h1-resident) plan."""
    bf, f32, dbl = 2, 4, 2  # bf16 bytes, f32 bytes, double buffering
    h1 = Np * Hp * bf                                      # resident h1
    tiles = dbl * (tm * tk + tk * Fp + tm * Fp) * bf       # A, X src, X root
    weights = dbl * 2 * (Fp * Hp + Hp * Hp) * bf           # Wl1/Wr1/Wl2/Wr2
    small = dbl * (2 * Hp + tm) * f32                      # biases + deg
    out = dbl * tm * Hp * f32
    acc = (tm * Fp + tm * Hp) * f32
    return h1 + tiles + weights + small + out + acc


# --------------------------------------------------------------------------
# Fused kernel: both SAGE layers in one call.
#   grid = (phase, dst-row tile i, src/K tile k); phase 0 builds h1 into a
#   VMEM scratch, phase 1 aggregates over that resident h1.
# --------------------------------------------------------------------------
def fused_kernel(a_ref, deg_ref, xs_ref, xr_ref,
                 wl1_ref, wr1_ref, wl2_ref, wr2_ref, b1_ref, b2_ref,
                 o_ref, acc1_ref, acc2_ref, h1_ref, *, tm, tk):
    p = pl.program_id(0)
    i = pl.program_id(1)
    k = pl.program_id(2)
    k_last = pl.num_programs(2) - 1

    a = a_ref[...]  # (tm, tk) bf16, raw 0/1 edge counts

    # ----- phase 0: layer-1 aggregation + epilogue (h1 stays in VMEM) -----
    @pl.when(p == 0)
    def _():
        @pl.when(k == 0)
        def _():
            acc1_ref[...] = jnp.zeros_like(acc1_ref)

        acc1_ref[...] += jnp.dot(a, xs_ref[...],
                                 preferred_element_type=jnp.float32)

        @pl.when(k == k_last)
        def _():
            inv_deg = pl.reciprocal(deg_ref[...], approx=True)      # (tm,1) f32
            agg = (acc1_ref[...] * inv_deg).astype(wl1_ref.dtype)   # mean, bf16
            h = jnp.dot(agg, wl1_ref[...], preferred_element_type=jnp.float32)
            h += jnp.dot(xr_ref[...], wr1_ref[...],
                         preferred_element_type=jnp.float32)
            h += b1_ref[...]
            h = jnp.maximum(h, 0.0)                                  # ReLU
            row0 = pl.multiple_of(i * tm, tm)
            h1_ref[pl.ds(row0, tm), :] = h.astype(h1_ref.dtype)

    # ----- phase 1: layer-2 aggregation over the VMEM-resident h1 -----
    @pl.when(p == 1)
    def _():
        @pl.when(k == 0)
        def _():
            acc2_ref[...] = jnp.zeros_like(acc2_ref)

        src0 = pl.multiple_of(k * tk, tk)
        acc2_ref[...] += jnp.dot(a, h1_ref[pl.ds(src0, tk), :],
                                 preferred_element_type=jnp.float32)

        @pl.when(k == k_last)
        def _():
            inv_deg = pl.reciprocal(deg_ref[...], approx=True)
            agg = (acc2_ref[...] * inv_deg).astype(wl2_ref.dtype)
            out = jnp.dot(agg, wl2_ref[...], preferred_element_type=jnp.float32)
            row0 = pl.multiple_of(i * tm, tm)
            out += jnp.dot(h1_ref[pl.ds(row0, tm), :], wr2_ref[...],
                           preferred_element_type=jnp.float32)
            out += b2_ref[...]
            o_ref[...] = out.astype(o_ref.dtype)


def fused_two_layer(A, deg, X, Wl1, Wr1, Wl2, Wr2, b1, b2, *, tm, tk,
                    vmem_limit):
    Np = A.shape[0]
    Fp = X.shape[1]
    Hp = Wl1.shape[1]

    flops = (2 * Np * Np * Fp + 4 * Np * Fp * Hp          # phase 0
             + 2 * Np * Np * Hp + 4 * Np * Hp * Hp)       # phase 1
    bytes_accessed = (2 * Np * Np * 2                      # A once per phase
                      + (Np // tm) * Np * Fp * 2           # X src re-streams
                      + Np * Fp * 2                        # X root
                      + 2 * (Fp * Hp + Hp * Hp) * 2        # weights
                      + Np * Hp * 4 + Np * 4)              # out + deg

    kernel = functools.partial(fused_kernel, tm=tm, tk=tk)
    return pl.pallas_call(
        kernel,
        out_shape=jax.ShapeDtypeStruct((Np, Hp), jnp.float32),
        grid_spec=pltpu.PrefetchScalarGridSpec(
            num_scalar_prefetch=0,
            grid=(2, Np // tm, Np // tk),
            in_specs=[
                pl.BlockSpec((tm, tk), lambda p, i, k: (i, k)),            # A
                pl.BlockSpec((tm, 1), lambda p, i, k: (i, 0)),             # deg
                # X is only needed in phase 0; pin the index in phase 1 so the
                # pipeline does not keep re-fetching it.
                pl.BlockSpec((tk, Fp), lambda p, i, k: (k * (1 - p), 0)),  # X src
                pl.BlockSpec((tm, Fp), lambda p, i, k: (i * (1 - p), 0)),  # X root
                pl.BlockSpec((Fp, Hp), lambda p, i, k: (0, 0)),            # W_l1
                pl.BlockSpec((Fp, Hp), lambda p, i, k: (0, 0)),            # W_r1
                pl.BlockSpec((Hp, Hp), lambda p, i, k: (0, 0)),            # W_l2
                pl.BlockSpec((Hp, Hp), lambda p, i, k: (0, 0)),            # W_r2
                pl.BlockSpec((1, Hp), lambda p, i, k: (0, 0)),             # b1
                pl.BlockSpec((1, Hp), lambda p, i, k: (0, 0)),             # b2
            ],
            # Phase 0 never writes the output; keep its block index pinned so
            # no garbage block is ever flushed to HBM.
            out_specs=pl.BlockSpec((tm, Hp), lambda p, i, k: (i * p, 0)),
            scratch_shapes=[
                pltpu.VMEM((tm, Fp), jnp.float32),   # layer-1 agg accumulator
                pltpu.VMEM((tm, Hp), jnp.float32),   # layer-2 agg accumulator
                pltpu.VMEM((Np, Hp), jnp.bfloat16),  # resident h1 (no HBM trip)
            ],
        ),
        compiler_params=pltpu.CompilerParams(
            # The h1 scratch carries cross-row-tile dependencies between the
            # two phases, so every axis must stay sequential here.
            dimension_semantics=("arbitrary", "arbitrary", "arbitrary"),
            vmem_limit_bytes=int(vmem_limit),
        ),
        cost_estimate=pl.CostEstimate(flops=int(flops), transcendentals=2 * Np,
                                      bytes_accessed=int(bytes_accessed)),
    )(A, deg, X, X, Wl1, Wr1, Wl2, Wr2, b1, b2)


# --------------------------------------------------------------------------
# Unfused per-layer kernel (fallback when h1 does not fit the VMEM budget).
# --------------------------------------------------------------------------
def sage_layer_kernel(a_ref, deg_ref, xs_ref, xr_ref, wl_ref, wr_ref, b_ref,
                      o_ref, acc_ref, *, apply_relu):
    k = pl.program_id(1)

    @pl.when(k == 0)
    def _():
        acc_ref[...] = jnp.zeros_like(acc_ref)

    acc_ref[...] += jnp.dot(a_ref[...], xs_ref[...],
                            preferred_element_type=jnp.float32)

    @pl.when(k == pl.num_programs(1) - 1)
    def _():
        inv_deg = pl.reciprocal(deg_ref[...], approx=True)
        agg = (acc_ref[...] * inv_deg).astype(wl_ref.dtype)
        out = jnp.dot(agg, wl_ref[...], preferred_element_type=jnp.float32)
        out += jnp.dot(xr_ref[...], wr_ref[...],
                       preferred_element_type=jnp.float32)
        out += b_ref[...]
        if apply_relu:
            out = jnp.maximum(out, 0.0)
        o_ref[...] = out.astype(o_ref.dtype)


def sage_layer(A, deg, X_src, X_root, W_l, W_r, b, *, apply_relu, out_dtype,
               tm, tk, vmem_limit):
    Np = A.shape[0]
    K = X_src.shape[1]
    Hp = W_l.shape[1]

    flops = 2 * Np * Np * K + 4 * Np * K * Hp
    bytes_accessed = (Np * Np * 2 + (Np // tm) * Np * K * 2 + Np * K * 2
                      + 2 * K * Hp * 2 + Np * Hp * jnp.dtype(out_dtype).itemsize
                      + Np * 4)

    kernel = functools.partial(sage_layer_kernel, apply_relu=apply_relu)
    return pl.pallas_call(
        kernel,
        out_shape=jax.ShapeDtypeStruct((Np, Hp), out_dtype),
        grid_spec=pltpu.PrefetchScalarGridSpec(
            num_scalar_prefetch=0,
            grid=(Np // tm, Np // tk),
            in_specs=[
                pl.BlockSpec((tm, tk), lambda i, k: (i, k)),   # A tile
                pl.BlockSpec((tm, 1), lambda i, k: (i, 0)),    # in-degree
                pl.BlockSpec((tk, K), lambda i, k: (k, 0)),    # source rows
                pl.BlockSpec((tm, K), lambda i, k: (i, 0)),    # root rows
                pl.BlockSpec((K, Hp), lambda i, k: (0, 0)),    # W_l
                pl.BlockSpec((K, Hp), lambda i, k: (0, 0)),    # W_r
                pl.BlockSpec((1, Hp), lambda i, k: (0, 0)),    # bias
            ],
            out_specs=pl.BlockSpec((tm, Hp), lambda i, k: (i, 0)),
            scratch_shapes=[pltpu.VMEM((tm, K), jnp.float32)],
        ),
        compiler_params=pltpu.CompilerParams(
            dimension_semantics=("parallel", "arbitrary"),  # v7x megacore rows
            vmem_limit_bytes=int(vmem_limit),
        ),
        cost_estimate=pl.CostEstimate(flops=int(flops), transcendentals=Np,
                                      bytes_accessed=int(bytes_accessed)),
    )(A, deg, X_src, X_root, W_l, W_r, b)


# --------------------------------------------------------------------------
# Glue: dense adjacency (raw 0/1 counts, exact in bf16) + f32 in-degrees.
# --------------------------------------------------------------------------
def build_adj_and_deg(edge_index, num_nodes):
    # TODO(synk): for realistic sparse graphs replace this dense O(N^2) A and
    # the A@X matmul with a CSR + scalar-prefetch gather / segment-mean kernel.
    src, dst = edge_index[0], edge_index[1]
    A = jnp.zeros((num_nodes, num_nodes), jnp.float32).at[dst, src].add(1.0)
    deg = jnp.maximum(A.sum(axis=1, keepdims=True), 1.0)   # clamp 0 -> 1
    return A, deg


# --------------------------------------------------------------------------
# EdgePredictor forward: gnn = SAGEConv -> ReLU -> SAGEConv
# --------------------------------------------------------------------------
def edge_predictor_forward(params, x, edge_index, *, tile_m=512, tile_k=512):
    N, F = x.shape
    H = params["W_l1"].shape[1]
    # Pad to the lane requirement only (A traffic/compute scale as Np^2).
    Np = _round_up(N, 128)
    Fp = _round_up(F, 128)
    Hp = _round_up(H, 128)

    A, deg = build_adj_and_deg(edge_index, N)
    A_p = _pad2d(A, Np, Np).astype(jnp.bfloat16)            # 0/1 counts: exact
    # Ghost rows get degree 1 so reciprocal never produces inf/NaN.
    deg_p = jnp.pad(deg, ((0, Np - N), (0, 0)), constant_values=1.0)
    X_p = _pad2d(x, Np, Fp).astype(jnp.bfloat16)

    Wl1 = _pad2d(params["W_l1"], Fp, Hp).astype(jnp.bfloat16)
    Wr1 = _pad2d(params["W_r1"], Fp, Hp).astype(jnp.bfloat16)
    Wl2 = _pad2d(params["W_l2"], Hp, Hp).astype(jnp.bfloat16)
    Wr2 = _pad2d(params["W_r2"], Hp, Hp).astype(jnp.bfloat16)
    b1 = jnp.pad(params["b1"], (0, Hp - H)).reshape(1, Hp).astype(jnp.float32)
    b2 = jnp.pad(params["b2"], (0, Hp - H)).reshape(1, Hp).astype(jnp.float32)

    budget = _vmem_budget_bytes()
    tm = _pick_tile(Np, tile_m)
    tk = _pick_tile(Np, tile_k)

    if _fused_vmem_bytes(Np, Fp, Hp, tm, tk) <= budget:
        # Fused: h1 stays resident in VMEM, no HBM round-trip for it.
        out = fused_two_layer(A_p, deg_p, X_p, Wl1, Wr1, Wl2, Wr2, b1, b2,
                              tm=tm, tk=tk, vmem_limit=budget)
    else:
        # h1 too large for VMEM: two-pass fallback; keep >=2 tiles on the
        # "parallel" row axis so v7x's second TensorCore has work.
        if Np // tm < 2 and Np >= 256:
            tm = _pick_tile(Np, Np // 2)
        h1 = sage_layer(A_p, deg_p, X_p, X_p, Wl1, Wr1, b1,
                        apply_relu=True, out_dtype=jnp.bfloat16,
                        tm=tm, tk=tk, vmem_limit=budget)
        out = sage_layer(A_p, deg_p, h1, h1, Wl2, Wr2, b2,
                         apply_relu=False, out_dtype=jnp.float32,
                         tm=tm, tk=tk, vmem_limit=budget)
    return out[:N, :H]  # node_embeddings


# --------------------------------------------------------------------------
# Pure-JAX f32 reference + params.
# --------------------------------------------------------------------------
def reference_forward(params, x, edge_index):
    A, deg = build_adj_and_deg(edge_index, x.shape[0])

    def layer(X, Wl, Wr, b):
        return ((A @ X) / deg) @ Wl + X @ Wr + b[None, :]

    h1 = jax.nn.relu(layer(x, params["W_l1"], params["W_r1"], params["b1"]))
    return layer(h1, params["W_l2"], params["W_r2"], params["b2"])


def init_params(key, in_channels, hidden_channels):
    ks = jax.random.split(key, 6)
    s1 = 1.0 / jnp.sqrt(in_channels)
    s2 = 1.0 / jnp.sqrt(hidden_channels)
    # Weights stored as (F_in, H) so the kernel computes X @ W directly
    # (equivalent to PyTorch Linear's x @ W.T).
    return {
        "W_l1": s1 * jax.random.normal(ks[0], (in_channels, hidden_channels), jnp.float32),
        "W_r1": s1 * jax.random.normal(ks[1], (in_channels, hidden_channels), jnp.float32),
        "b1":   s1 * jax.random.normal(ks[2], (hidden_channels,), jnp.float32),
        "W_l2": s2 * jax.random.normal(ks[3], (hidden_channels, hidden_channels), jnp.float32),
        "W_r2": s2 * jax.random.normal(ks[4], (hidden_channels, hidden_channels), jnp.float32),
        "b2":   s2 * jax.random.normal(ks[5], (hidden_channels,), jnp.float32),
    }


if __name__ == "__main__":
    key = jax.random.PRNGKey(0)
    k_x, k_e, k_p = jax.random.split(key, 3)

    num_nodes = 12
    in_channels = 16
    hidden_channels = 32
    num_edges = 40

    x = jax.random.normal(k_x, (num_nodes, in_channels), jnp.float32)
    edge_index = jax.random.randint(k_e, (2, num_edges), 0, num_nodes, jnp.int32)
    params = init_params(k_p, in_channels, hidden_channels)

    node_embeddings = jax.jit(edge_predictor_forward)(params, x, edge_index)
    jax.block_until_ready(node_embeddings)

    assert node_embeddings.shape == (num_nodes, hidden_channels)
    assert node_embeddings.dtype == jnp.float32

    # Validate bf16-MXU kernel against the f32 pure-JAX reference.
    ref = reference_forward(params, x, edge_index)
    rel_err = float(jnp.max(jnp.abs(node_embeddings - ref))
                    / (jnp.max(jnp.abs(ref)) + 1e-6))
    assert rel_err < 5e-2, f"mismatch vs f32 reference: rel_err={rel_err}"
    print("KERNEL_OK")
</pallas_src>

<mosaic_0001>
module attributes {stable_mosaic.version = 11 : i64} {
  func.func @fused_kernel(%arg0: i32, %arg1: i32, %arg2: i32, %arg3: memref<128x128xbf16, #tpu.memory_space<vmem>>, %arg4: memref<128x1xf32, #tpu.memory_space<vmem>>, %arg5: memref<128x128xbf16, #tpu.memory_space<vmem>>, %arg6: memref<128x128xbf16, #tpu.memory_space<vmem>>, %arg7: memref<128x128xbf16, #tpu.memory_space<vmem>>, %arg8: memref<128x128xbf16, #tpu.memory_space<vmem>>, %arg9: memref<128x128xbf16, #tpu.memory_space<vmem>>, %arg10: memref<128x128xbf16, #tpu.memory_space<vmem>>, %arg11: memref<1x128xf32, #tpu.memory_space<vmem>>, %arg12: memref<1x128xf32, #tpu.memory_space<vmem>>, %arg13: memref<128x128xf32, #tpu.memory_space<vmem>>, %arg14: memref<128x128xf32, #tpu.memory_space<vmem>>, %arg15: memref<128x128xf32, #tpu.memory_space<vmem>>, %arg16: memref<128x128xbf16, #tpu.memory_space<vmem>>) attributes {dimension_semantics = [#tpu.dimension_semantics<arbitrary>, #tpu.dimension_semantics<arbitrary>, #tpu.dimension_semantics<arbitrary>], iteration_bounds = array<i64: 2, 1, 1>, scalar_prefetch = 0 : i64, scratch_operands = 3 : i64, tpu.core_type = #tpu.core_type<tc>, window_params = [{transform_indices = @transform_0, window_bounds = array<i64: 128, 128>}, {transform_indices = @transform_1, window_bounds = array<i64: 128, 1>}, {transform_indices = @transform_2, window_bounds = array<i64: 128, 128>}, {transform_indices = @transform_3, window_bounds = array<i64: 128, 128>}, {pipeline_mode = #tpu.pipeline_mode<synchronous>, transform_indices = @transform_4, window_bounds = array<i64: 128, 128>}, {pipeline_mode = #tpu.pipeline_mode<synchronous>, transform_indices = @transform_5, window_bounds = array<i64: 128, 128>}, {pipeline_mode = #tpu.pipeline_mode<synchronous>, transform_indices = @transform_6, window_bounds = array<i64: 128, 128>}, {pipeline_mode = #tpu.pipeline_mode<synchronous>, transform_indices = @transform_7, window_bounds = array<i64: 128, 128>}, {pipeline_mode = #tpu.pipeline_mode<synchronous>, transform_indices = @transform_8, window_bounds = array<i64: 1, 128>}, {pipeline_mode = #tpu.pipeline_mode<synchronous>, transform_indices = @transform_9, window_bounds = array<i64: 1, 128>}, {transform_indices = @transform_10, window_bounds = array<i64: 128, 128>}]} {
    %c0 = arith.constant 0 : index
    %c0_0 = arith.constant 0 : index
    %0 = vector.load %arg3[%c0, %c0_0] : memref<128x128xbf16, #tpu.memory_space<vmem>>, vector<128x128xbf16>
    %c0_i32 = arith.constant 0 : i32
    %1 = arith.cmpi eq, %arg0, %c0_i32 : i32
    %2 = arith.extui %1 : i1 to i32
    %c0_i32_1 = arith.constant 0 : i32
    %3 = arith.cmpi ne, %2, %c0_i32_1 : i32
    scf.if %3 {
      %c0_i32_3 = arith.constant 0 : i32
      %7 = arith.cmpi eq, %arg2, %c0_i32_3 : i32
      %8 = arith.extui %7 : i1 to i32
      %c0_i32_4 = arith.constant 0 : i32
      %9 = arith.cmpi ne, %8, %c0_i32_4 : i32
      scf.if %9 {
        %cst_13 = arith.constant 0.000000e+00 : f32
        %18 = vector.broadcast %cst_13 : f32 to vector<128x128xf32>
        %c0_14 = arith.constant 0 : index
        %c0_15 = arith.constant 0 : index
        %19 = vector.load %arg14[%c0_14, %c0_15] : memref<128x128xf32, #tpu.memory_space<vmem>>, vector<128x128xf32>
        tpu.vector_store %arg14[%c0_14, %c0_15], %18 {strides = array<i32>} : memref<128x128xf32, #tpu.memory_space<vmem>>, vector<128x128xf32>,
      } else {
      }
      %c0_5 = arith.constant 0 : index
      %c0_6 = arith.constant 0 : index
      %10 = vector.load %arg14[%c0_5, %c0_6] : memref<128x128xf32, #tpu.memory_space<vmem>>, vector<128x128xf32>
      %c0_7 = arith.constant 0 : index
      %c0_8 = arith.constant 0 : index
      %11 = vector.load %arg5[%c0_7, %c0_8] : memref<128x128xbf16, #tpu.memory_space<vmem>>, vector<128x128xbf16>
      %cst = arith.constant dense<0.000000e+00> : vector<128x128xf32>
      %12 = tpu.matmul %0, %11, %cst {dimension_numbers = #tpu.dot_dimension_numbers<[1], [0], [0], [1], [0, 0, 1, 1], [], []>} : vector<128x128xbf16>, vector<128x128xbf16>, vector<128x128xf32> -> vector<128x128xf32>
      %13 = arith.addf %10, %12 : vector<128x128xf32>
      %c0_9 = arith.constant 0 : index
      %c0_10 = arith.constant 0 : index
      %14 = vector.load %arg14[%c0_9, %c0_10] : memref<128x128xf32, #tpu.memory_space<vmem>>, vector<128x128xf32>
      tpu.vector_store %arg14[%c0_9, %c0_10], %13 {strides = array<i32>} : memref<128x128xf32, #tpu.memory_space<vmem>>, vector<128x128xf32>,
      %c0_i32_11 = arith.constant 0 : i32
      %15 = arith.cmpi eq, %arg2, %c0_i32_11 : i32
      %16 = arith.extui %15 : i1 to i32
      %c0_i32_12 = arith.constant 0 : i32
      %17 = arith.cmpi ne, %16, %c0_i32_12 : i32
      scf.if %17 {
        %c0_13 = arith.constant 0 : index
        %c0_14 = arith.constant 0 : index
        %18 = vector.load %arg4[%c0_13, %c0_14] : memref<128x1xf32, #tpu.memory_space<vmem>>, vector<128x1xf32>
        %19 = tpu.reciprocal %18 {approx = true} : vector<128x1xf32> -> vector<128x1xf32>
        %c0_15 = arith.constant 0 : index
        %c0_16 = arith.constant 0 : index
        %20 = vector.load %arg14[%c0_15, %c0_16] : memref<128x128xf32, #tpu.memory_space<vmem>>, vector<128x128xf32>
        %21 = vector.broadcast %19 : vector<128x1xf32> to vector<128x128xf32>
        %22 = arith.mulf %20, %21 : vector<128x128xf32>
        %23 = arith.truncf %22 : vector<128x128xf32> to vector<128x128xbf16>
        %c0_17 = arith.constant 0 : index
        %c0_18 = arith.constant 0 : index
        %24 = vector.load %arg7[%c0_17, %c0_18] : memref<128x128xbf16, #tpu.memory_space<vmem>>, vector<128x128xbf16>
        %cst_19 = arith.constant dense<0.000000e+00> : vector<128x128xf32>
        %25 = tpu.matmul %23, %24, %cst_19 {dimension_numbers = #tpu.dot_dimension_numbers<[1], [0], [0], [1], [0, 0, 1, 1], [], []>} : vector<128x128xbf16>, vector<128x128xbf16>, vector<128x128xf32> -> vector<128x128xf32>
        %c0_20 = arith.constant 0 : index
        %c0_21 = arith.constant 0 : index
        %26 = vector.load %arg6[%c0_20, %c0_21] : memref<128x128xbf16, #tpu.memory_space<vmem>>, vector<128x128xbf16>
        %c0_22 = arith.constant 0 : index
        %c0_23 = arith.constant 0 : index
        %27 = vector.load %arg8[%c0_22, %c0_23] : memref<128x128xbf16, #tpu.memory_space<vmem>>, vector<128x128xbf16>
        %cst_24 = arith.constant dense<0.000000e+00> : vector<128x128xf32>
        %28 = tpu.matmul %26, %27, %cst_24 {dimension_numbers = #tpu.dot_dimension_numbers<[1], [0], [0], [1], [0, 0, 1, 1], [], []>} : vector<128x128xbf16>, vector<128x128xbf16>, vector<128x128xf32> -> vector<128x128xf32>
        %29 = arith.addf %25, %28 : vector<128x128xf32>
        %c0_25 = arith.constant 0 : index
        %c0_26 = arith.constant 0 : index
        %30 = vector.load %arg11[%c0_25, %c0_26] : memref<1x128xf32, #tpu.memory_space<vmem>>, vector<1x128xf32>
        %31 = vector.broadcast %30 : vector<1x128xf32> to vector<128x128xf32>
        %32 = arith.addf %29, %31 : vector<128x128xf32>
        %cst_27 = arith.constant 0.000000e+00 : f32
        %33 = vector.broadcast %cst_27 : f32 to vector<128x128xf32>
        %34 = arith.maximumf %32, %33 : vector<128x128xf32>
        %c128_i32 = arith.constant 128 : i32
        %35 = arith.muli %arg1, %c128_i32 : i32
        %36 = tpu.assume_multiple %35, 128 : i32
        %37 = arith.truncf %34 : vector<128x128xf32> to vector<128x128xbf16>
        %38 = arith.index_cast %36 : i32 to index
        %c0_28 = arith.constant 0 : index
        %39 = vector.load %arg16[%38, %c0_28] : memref<128x128xbf16, #tpu.memory_space<vmem>>, vector<128x128xbf16>
        tpu.vector_store %arg16[%38, %c0_28], %37 {strides = array<i32>} : memref<128x128xbf16, #tpu.memory_space<vmem>>, vector<128x128xbf16>,
      } else {
      }
    } else {
    }
    %c1_i32 = arith.constant 1 : i32
    %4 = arith.cmpi eq, %arg0, %c1_i32 : i32
    %5 = arith.extui %4 : i1 to i32
    %c0_i32_2 = arith.constant 0 : i32
    %6 = arith.cmpi ne, %5, %c0_i32_2 : i32
    scf.if %6 {
      %c0_i32_3 = arith.constant 0 : i32
      %7 = arith.cmpi eq, %arg2, %c0_i32_3 : i32
      %8 = arith.extui %7 : i1 to i32
      %c0_i32_4 = arith.constant 0 : i32
      %9 = arith.cmpi ne, %8, %c0_i32_4 : i32
      scf.if %9 {
        %cst_12 = arith.constant 0.000000e+00 : f32
        %21 = vector.broadcast %cst_12 : f32 to vector<128x128xf32>
        %c0_13 = arith.constant 0 : index
        %c0_14 = arith.constant 0 : index
        %22 = vector.load %arg15[%c0_13, %c0_14] : memref<128x128xf32, #tpu.memory_space<vmem>>, vector<128x128xf32>
        tpu.vector_store %arg15[%c0_13, %c0_14], %21 {strides = array<i32>} : memref<128x128xf32, #tpu.memory_space<vmem>>, vector<128x128xf32>,
      } else {
      }
      %c128_i32 = arith.constant 128 : i32
      %10 = arith.muli %arg2, %c128_i32 : i32
      %11 = tpu.assume_multiple %10, 128 : i32
      %c0_5 = arith.constant 0 : index
      %c0_6 = arith.constant 0 : index
      %12 = vector.load %arg15[%c0_5, %c0_6] : memref<128x128xf32, #tpu.memory_space<vmem>>, vector<128x128xf32>
      %13 = arith.index_cast %11 : i32 to index
      %c0_7 = arith.constant 0 : index
      %14 = vector.load %arg16[%13, %c0_7] : memref<128x128xbf16, #tpu.memory_space<vmem>>, vector<128x128xbf16>
      %cst = arith.constant dense<0.000000e+00> : vector<128x128xf32>
      %15 = tpu.matmul %0, %14, %cst {dimension_numbers = #tpu.dot_dimension_numbers<[1], [0], [0], [1], [0, 0, 1, 1], [], []>} : vector<128x128xbf16>, vector<128x128xbf16>, vector<128x128xf32> -> vector<128x128xf32>
      %16 = arith.addf %12, %15 : vector<128x128xf32>
      %c0_8 = arith.constant 0 : index
      %c0_9 = arith.constant 0 : index
      %17 = vector.load %arg15[%c0_8, %c0_9] : memref<128x128xf32, #tpu.memory_space<vmem>>, vector<128x128xf32>
      tpu.vector_store %arg15[%c0_8, %c0_9], %16 {strides = array<i32>} : memref<128x128xf32, #tpu.memory_space<vmem>>, vector<128x128xf32>,
      %c0_i32_10 = arith.constant 0 : i32
      %18 = arith.cmpi eq, %arg2, %c0_i32_10 : i32
      %19 = arith.extui %18 : i1 to i32
      %c0_i32_11 = arith.constant 0 : i32
      %20 = arith.cmpi ne, %19, %c0_i32_11 : i32
      scf.if %20 {
        %c0_12 = arith.constant 0 : index
        %c0_13 = arith.constant 0 : index
        %21 = vector.load %arg4[%c0_12, %c0_13] : memref<128x1xf32, #tpu.memory_space<vmem>>, vector<128x1xf32>
        %22 = tpu.reciprocal %21 {approx = true} : vector<128x1xf32> -> vector<128x1xf32>
        %c0_14 = arith.constant 0 : index
        %c0_15 = arith.constant 0 : index
        %23 = vector.load %arg15[%c0_14, %c0_15] : memref<128x128xf32, #tpu.memory_space<vmem>>, vector<128x128xf32>
        %24 = vector.broadcast %22 : vector<128x1xf32> to vector<128x128xf32>
        %25 = arith.mulf %23, %24 : vector<128x128xf32>
        %26 = arith.truncf %25 : vector<128x128xf32> to vector<128x128xbf16>
        %c0_16 = arith.constant 0 : index
        %c0_17 = arith.constant 0 : index
        %27 = vector.load %arg9[%c0_16, %c0_17] : memref<128x128xbf16, #tpu.memory_space<vmem>>, vector<128x128xbf16>
        %cst_18 = arith.constant dense<0.000000e+00> : vector<128x128xf32>
        %28 = tpu.matmul %26, %27, %cst_18 {dimension_numbers = #tpu.dot_dimension_numbers<[1], [0], [0], [1], [0, 0, 1, 1], [], []>} : vector<128x128xbf16>, vector<128x128xbf16>, vector<128x128xf32> -> vector<128x128xf32>
        %c128_i32_19 = arith.constant 128 : i32
        %29 = arith.muli %arg1, %c128_i32_19 : i32
        %30 = tpu.assume_multiple %29, 128 : i32
        %31 = arith.index_cast %30 : i32 to index
        %c0_20 = arith.constant 0 : index
        %32 = vector.load %arg16[%31, %c0_20] : memref<128x128xbf16, #tpu.memory_space<vmem>>, vector<128x128xbf16>
        %c0_21 = arith.constant 0 : index
        %c0_22 = arith.constant 0 : index
        %33 = vector.load %arg10[%c0_21, %c0_22] : memref<128x128xbf16, #tpu.memory_space<vmem>>, vector<128x128xbf16>
        %cst_23 = arith.constant dense<0.000000e+00> : vector<128x128xf32>
        %34 = tpu.matmul %32, %33, %cst_23 {dimension_numbers = #tpu.dot_dimension_numbers<[1], [0], [0], [1], [0, 0, 1, 1], [], []>} : vector<128x128xbf16>, vector<128x128xbf16>, vector<128x128xf32> -> vector<128x128xf32>
        %35 = arith.addf %28, %34 : vector<128x128xf32>
        %c0_24 = arith.constant 0 : index
        %c0_25 = arith.constant 0 : index
        %36 = vector.load %arg12[%c0_24, %c0_25] : memref<1x128xf32, #tpu.memory_space<vmem>>, vector<1x128xf32>
        %37 = vector.broadcast %36 : vector<1x128xf32> to vector<128x128xf32>
        %38 = arith.addf %35, %37 : vector<128x128xf32>
        %c0_26 = arith.constant 0 : index
        %c0_27 = arith.constant 0 : index
        %39 = vector.load %arg13[%c0_26, %c0_27] : memref<128x128xf32, #tpu.memory_space<vmem>>, vector<128x128xf32>
        tpu.vector_store %arg13[%c0_26, %c0_27], %38 {strides = array<i32>} : memref<128x128xf32, #tpu.memory_space<vmem>>, vector<128x128xf32>,
      } else {
      }
    } else {
    }
    return
  }
  func.func @transform_0(%arg0: i32, %arg1: i32, %arg2: i32) -> (i32, i32) {
    %c0_i32 = arith.constant 0 : i32
    return %arg1, %arg2 : i32, i32
  }
  func.func @transform_1(%arg0: i32, %arg1: i32, %arg2: i32) -> (i32, i32) {
    %c0_i32 = arith.constant 0 : i32
    %c0_i32_0 = arith.constant 0 : i32
    return %arg1, %c0_i32 : i32, i32
  }
  func.func @transform_2(%arg0: i32, %arg1: i32, %arg2: i32) -> (i32, i32) {
    %c1_i32 = arith.constant 1 : i32
    %0 = arith.subi %c1_i32, %arg0 : i32
    %1 = arith.muli %arg2, %0 : i32
    %c0_i32 = arith.constant 0 : i32
    %c0_i32_0 = arith.constant 0 : i32
    return %1, %c0_i32 : i32, i32
  }
  func.func @transform_3(%arg0: i32, %arg1: i32, %arg2: i32) -> (i32, i32) {
    %c1_i32 = arith.constant 1 : i32
    %0 = arith.subi %c1_i32, %arg0 : i32
    %1 = arith.muli %arg1, %0 : i32
    %c0_i32 = arith.constant 0 : i32
    %c0_i32_0 = arith.constant 0 : i32
    return %1, %c0_i32 : i32, i32
  }
  func.func @transform_4(%arg0: i32, %arg1: i32, %arg2: i32) -> (i32, i32) {
    %c0_i32 = arith.constant 0 : i32
    %c0_i32_0 = arith.constant 0 : i32
    %c0_i32_1 = arith.constant 0 : i32
    return %c0_i32, %c0_i32_0 : i32, i32
  }
  func.func @transform_5(%arg0: i32, %arg1: i32, %arg2: i32) -> (i32, i32) {
    %c0_i32 = arith.constant 0 : i32
    %c0_i32_0 = arith.constant 0 : i32
    %c0_i32_1 = arith.constant 0 : i32
    return %c0_i32, %c0_i32_0 : i32, i32
  }
  func.func @transform_6(%arg0: i32, %arg1: i32, %arg2: i32) -> (i32, i32) {
    %c0_i32 = arith.constant 0 : i32
    %c0_i32_0 = arith.constant 0 : i32
    %c0_i32_1 = arith.constant 0 : i32
    return %c0_i32, %c0_i32_0 : i32, i32
  }
  func.func @transform_7(%arg0: i32, %arg1: i32, %arg2: i32) -> (i32, i32) {
    %c0_i32 = arith.constant 0 : i32
    %c0_i32_0 = arith.constant 0 : i32
    %c0_i32_1 = arith.constant 0 : i32
    return %c0_i32, %c0_i32_0 : i32, i32
  }
  func.func @transform_8(%arg0: i32, %arg1: i32, %arg2: i32) -> (i32, i32) {
    %c0_i32 = arith.constant 0 : i32
    %c0_i32_0 = arith.constant 0 : i32
    %c0_i32_1 = arith.constant 0 : i32
    return %c0_i32, %c0_i32_0 : i32, i32
  }
  func.func @transform_9(%arg0: i32, %arg1: i32, %arg2: i32) -> (i32, i32) {
    %c0_i32 = arith.constant 0 : i32
    %c0_i32_0 = arith.constant 0 : i32
    %c0_i32_1 = arith.constant 0 : i32
    return %c0_i32, %c0_i32_0 : i32, i32
  }
  func.func @transform_10(%arg0: i32, %arg1: i32, %arg2: i32) -> (i32, i32) {
    %0 = arith.muli %arg1, %arg0 : i32
    %c0_i32 = arith.constant 0 : i32
    %c0_i32_0 = arith.constant 0 : i32
    return %0, %c0_i32 : i32, i32
  }
}

</mosaic_0001>

<llo_original>
// kernel: edge_predictor_forward.1
$region0: #{edge_predictor_forward.1}
  #allocation0 [shape = 'u32[]', space=smem, size = 0x4, offset = 0x4, fixed_abs, tag = 'smem constant byte address 0x4 - core index']
  #allocation1 [shape = 'u32[144,128]{1,0:T(1,128)}', space=vmem, size = 0x12000, scoped, tag = 'internal scratch']
  #allocation2 [shape = 'f32[128,128]{1,0:T(8,128)}', space=vmem, size = 0x10000, scoped, tag = 'scratch operand']
  #allocation3 [shape = 'f32[128,128]{1,0:T(8,128)}', space=vmem, size = 0x10000, scoped, tag = 'scratch operand']
  #allocation4 [shape = 'bf16[128,128]{1,0:T(16,128)(2,1)}', space=vmem, size = 0x8000, scoped, tag = 'scratch operand']
  %s0 = inlined_call_operand.vmem [shape: bf16[128,128], index: 0, kind: input, shape index: {}]
  %s1 = inlined_call_operand.vmem [shape: f32[128,1], index: 1, kind: input, shape index: {}]
  %s2 = inlined_call_operand.vmem [shape: bf16[128,128], index: 2, kind: input, shape index: {}, may-alias: {2,3}]
  %s3 = inlined_call_operand.vmem [shape: bf16[128,128], index: 3, kind: input, shape index: {}, may-alias: {2,3}]
  %s4 = inlined_call_operand.vmem [shape: bf16[128,128], index: 4, kind: input, shape index: {}]
  %s5 = inlined_call_operand.vmem [shape: bf16[128,128], index: 5, kind: input, shape index: {}]
  %s6 = inlined_call_operand.vmem [shape: bf16[128,128], index: 6, kind: input, shape index: {}]
  %s7 = inlined_call_operand.vmem [shape: bf16[128,128], index: 7, kind: input, shape index: {}]
  %s8 = inlined_call_operand.vmem [shape: f32[1,128], index: 8, kind: input, shape index: {}]
  %s9 = inlined_call_operand.vmem [shape: f32[1,128], index: 9, kind: input, shape index: {}]
  %s10 = inlined_call_operand.vmem [shape: f32[128,128], index: 10, kind: output, shape index: {}]
  %s11 = sld [smem:[#allocation0]]
  $region97: #{edge_predictor_forward.1} parent=0
    _
  %s13 = ssub.s32 1, %s11
  %s14 = scalar_select 0, %s13, %s11
  loop: start=0, step=1, limit=4
  $region2: #{edge_predictor_forward.1} parent=0 // loop_pre_header
    _
  $region3: #{edge_predictor_forward.1} parent=0 // loop_header
    %s16 = sphi 0, %s20
    %p17 = scmp.ge.s32.totalorder %s16, 4
    %s23 = sphi 0, %s42
    %s24 = sphi 0, %s38
    %s25 = sphi 0, %s34
    %s26 = sphi 0, %s23
    %s27 = sphi 0, %s24
    %s28 = sphi 0, %s25
    %s29 = sphi 0, %s26
    %s30 = sphi 0, %s27
    %s31 = sphi 0, %s28
    %s47 = sphi 0, %s49
    %s50 = sphi 0, %s47
    %s51 = sphi 0, %s50
    %s67 = sphi 0, %s51
    %s73 = sphi 0, %s75
    %s76 = sphi 0, %s73
    %s77 = sphi 0, %s76
    %s93 = sphi 0, %s77
    %s103 = sphi 0, %s105
    %s106 = sphi 0, %s103
    %s107 = sphi 0, %s106
    %s123 = sphi 0, %s107
    %s133 = sphi 0, %s135
    %s136 = sphi 0, %s133
    %s137 = sphi 0, %s136
    %s153 = sphi 0, %s137
    %s157 = sphi 0, %s157
    %s159 = sphi 0, %s157
    %s160 = sphi 0, %s159
    %s174 = sphi 0, %s160
    %s178 = sphi 0, %s178
    %s180 = sphi 0, %s178
    %s181 = sphi 0, %s180
    %s195 = sphi 0, %s181
    %s199 = sphi 0, %s199
    %s201 = sphi 0, %s199
    %s202 = sphi 0, %s201
    %s216 = sphi 0, %s202
    %s220 = sphi 0, %s220
    %s222 = sphi 0, %s220
    %s223 = sphi 0, %s222
    %s237 = sphi 0, %s223
    %s241 = sphi 0, %s241
    %s243 = sphi 0, %s241
    %s244 = sphi 0, %s243
    %s258 = sphi 0, %s244
    %s262 = sphi 0, %s262
    %s264 = sphi 0, %s262
    %s265 = sphi 0, %s264
    %s279 = sphi 0, %s265
    %s287 = sphi 0, %s289
    %s290 = sphi 0, %s287
    %s291 = sphi 0, %s290
    %s307 = sphi 0, %s291
  $region4: #{edge_predictor_forward.1} parent=0 // loop_header_branch
    %19 = sbr.rel (%p17) target = $region8
  $region5: #{edge_predictor_forward.1} parent=0 // loop_body
    %s21 = ssub.s32 %s16, 1
    %s22 = ssub.s32 %s16, 2
    %s32 = sadd.s32 1, %s25
    %p33 = scmp.ge.s32.totalorder %s32, 1
    %s34 = scalar_select %p33, 0, %s32
    %s35 = sadd.s32 1, %s24
    %s36 = scalar_select %p33, %s35, %s24
    %p37 = scmp.ge.s32.totalorder %s36, 1
    %s38 = scalar_select %p37, 0, %s36
    %s39 = sadd.s32 1, %s23
    %s40 = scalar_select %p37, %s39, %s23
    %p41 = scmp.ge.s32.totalorder %s40, 2
    %s42 = scalar_select %p41, 0, %s40
    %s43 = ssub.s32 %s24, %s38
    %s44 = ssub.s32 %s25, %s34
    %s45 = sor.u32 %s43, %s44
    %p46 = scmp.eq.s32.totalorder %s45, 0
    %s48 = sadd.s32 %s47, 1
    %s49 = scalar_select %p46, %s47, %s48
    %p52 = pneg %p46
    %p53 = scmp.eq.s32.totalorder %s16, 1
    %p54 = por %p52, %p53
    %p55 = scmp.ne.s32.totalorder %s47, %s50
    %p56 = scmp.eq.s32.totalorder %s16, 0
    %p57 = por %p55, %p56
    %p58 = scmp.ne.s32.totalorder %s47, %s50
    %p59 = scmp.eq.s32.totalorder %s21, 1
    %p60 = por %p58, %p59
    %p61 = scmp.ne.s32.totalorder %s50, %s51
    %p62 = scmp.eq.s32.totalorder %s21, 0
    %p63 = por %p61, %p62
    %p64 = scmp.ne.s32.totalorder %s50, %s51
    %p65 = scmp.eq.s32.totalorder %s22, 1
    %p66 = por %p64, %p65
    %p68 = scmp.ne.s32.totalorder %s51, %s67
    %p69 = scmp.eq.s32.totalorder %s22, 0
    %p70 = por %p68, %p69
    %s71 = ssub.s32 %s24, %s38
    %p72 = scmp.eq.s32.totalorder %s71, 0
    %s74 = sadd.s32 %s73, 1
    %s75 = scalar_select %p72, %s73, %s74
    %p78 = pneg %p72
    %p79 = scmp.eq.s32.totalorder %s16, 1
    %p80 = por %p78, %p79
    %p81 = scmp.ne.s32.totalorder %s73, %s76
    %p82 = scmp.eq.s32.totalorder %s16, 0
    %p83 = por %p81, %p82
    %p84 = scmp.ne.s32.totalorder %s73, %s76
    %p85 = scmp.eq.s32.totalorder %s21, 1
    %p86 = por %p84, %p85
    %p87 = scmp.ne.s32.totalorder %s76, %s77
    %p88 = scmp.eq.s32.totalorder %s21, 0
    %p89 = por %p87, %p88
    %p90 = scmp.ne.s32.totalorder %s76, %s77
    %p91 = scmp.eq.s32.totalorder %s22, 1
    %p92 = por %p90, %p91
    %p94 = scmp.ne.s32.totalorder %s77, %s93
    %p95 = scmp.eq.s32.totalorder %s22, 0
    %p96 = por %p94, %p95
    %s97 = ssub.s32 1, %s23
    %s98 = smul.u32 %s25, %s97
    %s99 = ssub.s32 1, %s42
    %s100 = smul.u32 %s34, %s99
    %s101 = ssub.s32 %s98, %s100
    %p102 = scmp.eq.s32.totalorder %s101, 0
    %s104 = sadd.s32 %s103, 1
    %s105 = scalar_select %p102, %s103, %s104
    %p108 = pneg %p102
    %p109 = scmp.eq.s32.totalorder %s16, 1
    %p110 = por %p108, %p109
    %p111 = scmp.ne.s32.totalorder %s103, %s106
    %p112 = scmp.eq.s32.totalorder %s16, 0
    %p113 = por %p111, %p112
    %p114 = scmp.ne.s32.totalorder %s103, %s106
    %p115 = scmp.eq.s32.totalorder %s21, 1
    %p116 = por %p114, %p115
    %p117 = scmp.ne.s32.totalorder %s106, %s107
    %p118 = scmp.eq.s32.totalorder %s21, 0
    %p119 = por %p117, %p118
    %p120 = scmp.ne.s32.totalorder %s106, %s107
    %p121 = scmp.eq.s32.totalorder %s22, 1
    %p122 = por %p120, %p121
    %p124 = scmp.ne.s32.totalorder %s107, %s123
    %p125 = scmp.eq.s32.totalorder %s22, 0
    %p126 = por %p124, %p125
    %s127 = ssub.s32 1, %s23
    %s128 = smul.u32 %s24, %s127
    %s129 = ssub.s32 1, %s42
    %s130 = smul.u32 %s38, %s129
    %s131 = ssub.s32 %s128, %s130
    %p132 = scmp.eq.s32.totalorder %s131, 0
    %s134 = sadd.s32 %s133, 1
    %s135 = scalar_select %p132, %s133, %s134
    %p138 = pneg %p132
    %p139 = scmp.eq.s32.totalorder %s16, 1
    %p140 = por %p138, %p139
    %p141 = scmp.ne.s32.totalorder %s133, %s136
    %p142 = scmp.eq.s32.totalorder %s16, 0
    %p143 = por %p141, %p142
    %p144 = scmp.ne.s32.totalorder %s133, %s136
    %p145 = scmp.eq.s32.totalorder %s21, 1
    %p146 = por %p144, %p145
    %p147 = scmp.ne.s32.totalorder %s136, %s137
    %p148 = scmp.eq.s32.totalorder %s21, 0
    %p149 = por %p147, %p148
    %p150 = scmp.ne.s32.totalorder %s136, %s137
    %p151 = scmp.eq.s32.totalorder %s22, 1
    %p152 = por %p150, %p151
    %p154 = scmp.ne.s32.totalorder %s137, %s153
    %p155 = scmp.eq.s32.totalorder %s22, 0
    %p156 = por %p154, %p155
    %s158 = sadd.s32 %s157, 1
    %p161 = scmp.eq.s32.totalorder %s16, 1
    %p162 = scmp.ne.s32.totalorder %s157, %s159
    %p163 = scmp.eq.s32.totalorder %s16, 0
    %p164 = por %p162, %p163
    %p165 = scmp.ne.s32.totalorder %s157, %s159
    %p166 = scmp.eq.s32.totalorder %s21, 1
    %p167 = por %p165, %p166
    %p168 = scmp.ne.s32.totalorder %s159, %s160
    %p169 = scmp.eq.s32.totalorder %s21, 0
    %p170 = por %p168, %p169
    %p171 = scmp.ne.s32.totalorder %s159, %s160
    %p172 = scmp.eq.s32.totalorder %s22, 1
    %p173 = por %p171, %p172
    %p175 = scmp.ne.s32.totalorder %s160, %s174
    %p176 = scmp.eq.s32.totalorder %s22, 0
    %p177 = por %p175, %p176
    %s179 = sadd.s32 %s178, 1
    %p182 = scmp.eq.s32.totalorder %s16, 1
    %p183 = scmp.ne.s32.totalorder %s178, %s180
    %p184 = scmp.eq.s32.totalorder %s16, 0
    %p185 = por %p183, %p184
    %p186 = scmp.ne.s32.totalorder %s178, %s180
    %p187 = scmp.eq.s32.totalorder %s21, 1
    %p188 = por %p186, %p187
    %p189 = scmp.ne.s32.totalorder %s180, %s181
    %p190 = scmp.eq.s32.totalorder %s21, 0
    %p191 = por %p189, %p190
    %p192 = scmp.ne.s32.totalorder %s180, %s181
    %p193 = scmp.eq.s32.totalorder %s22, 1
    %p194 = por %p192, %p193
    %p196 = scmp.ne.s32.totalorder %s181, %s195
    %p197 = scmp.eq.s32.totalorder %s22, 0
    %p198 = por %p196, %p197
    %s200 = sadd.s32 %s199, 1
    %p203 = scmp.eq.s32.totalorder %s16, 1
    %p204 = scmp.ne.s32.totalorder %s199, %s201
    %p205 = scmp.eq.s32.totalorder %s16, 0
    %p206 = por %p204, %p205
    %p207 = scmp.ne.s32.totalorder %s199, %s201
    %p208 = scmp.eq.s32.totalorder %s21, 1
    %p209 = por %p207, %p208
    %p210 = scmp.ne.s32.totalorder %s201, %s202
    %p211 = scmp.eq.s32.totalorder %s21, 0
    %p212 = por %p210, %p211
    %p213 = scmp.ne.s32.totalorder %s201, %s202
    %p214 = scmp.eq.s32.totalorder %s22, 1
    %p215 = por %p213, %p214
    %p217 = scmp.ne.s32.totalorder %s202, %s216
    %p218 = scmp.eq.s32.totalorder %s22, 0
    %p219 = por %p217, %p218
    %s221 = sadd.s32 %s220, 1
    %p224 = scmp.eq.s32.totalorder %s16, 1
    %p225 = scmp.ne.s32.totalorder %s220, %s222
    %p226 = scmp.eq.s32.totalorder %s16, 0
    %p227 = por %p225, %p226
    %p228 = scmp.ne.s32.totalorder %s220, %s222
    %p229 = scmp.eq.s32.totalorder %s21, 1
    %p230 = por %p228, %p229
    %p231 = scmp.ne.s32.totalorder %s222, %s223
    %p232 = scmp.eq.s32.totalorder %s21, 0
    %p233 = por %p231, %p232
    %p234 = scmp.ne.s32.totalorder %s222, %s223
    %p235 = scmp.eq.s32.totalorder %s22, 1
    %p236 = por %p234, %p235
    %p238 = scmp.ne.s32.totalorder %s223, %s237
    %p239 = scmp.eq.s32.totalorder %s22, 0
    %p240 = por %p238, %p239
    %s242 = sadd.s32 %s241, 1
    %p245 = scmp.eq.s32.totalorder %s16, 1
    %p246 = scmp.ne.s32.totalorder %s241, %s243
    %p247 = scmp.eq.s32.totalorder %s16, 0
    %p248 = por %p246, %p247
    %p249 = scmp.ne.s32.totalorder %s241, %s243
    %p250 = scmp.eq.s32.totalorder %s21, 1
    %p251 = por %p249, %p250
    %p252 = scmp.ne.s32.totalorder %s243, %s244
    %p253 = scmp.eq.s32.totalorder %s21, 0
    %p254 = por %p252, %p253
    %p255 = scmp.ne.s32.totalorder %s243, %s244
    %p256 = scmp.eq.s32.totalorder %s22, 1
    %p257 = por %p255, %p256
    %p259 = scmp.ne.s32.totalorder %s244, %s258
    %p260 = scmp.eq.s32.totalorder %s22, 0
    %p261 = por %p259, %p260
    %s263 = sadd.s32 %s262, 1
    %p266 = scmp.eq.s32.totalorder %s16, 1
    %p267 = scmp.ne.s32.totalorder %s262, %s264
    %p268 = scmp.eq.s32.totalorder %s16, 0
    %p269 = por %p267, %p268
    %p270 = scmp.ne.s32.totalorder %s262, %s264
    %p271 = scmp.eq.s32.totalorder %s21, 1
    %p272 = por %p270, %p271
    %p273 = scmp.ne.s32.totalorder %s264, %s265
    %p274 = scmp.eq.s32.totalorder %s21, 0
    %p275 = por %p273, %p274
    %p276 = scmp.ne.s32.totalorder %s264, %s265
    %p277 = scmp.eq.s32.totalorder %s22, 1
    %p278 = por %p276, %p277
    %p280 = scmp.ne.s32.totalorder %s265, %s279
    %p281 = scmp.eq.s32.totalorder %s22, 0
    %p282 = por %p280, %p281
    %s283 = smul.u32 %s24, %s23
    %s284 = smul.u32 %s38, %s42
    %s285 = ssub.s32 %s283, %s284
    %p286 = scmp.eq.s32.totalorder %s285, 0
    %s288 = sadd.s32 %s287, 1
    %s289 = scalar_select %p286, %s287, %s288
    %p292 = pneg %p286
    %p293 = scmp.eq.s32.totalorder %s16, 1
    %p294 = por %p292, %p293
    %p295 = scmp.ne.s32.totalorder %s287, %s290
    %p296 = scmp.eq.s32.totalorder %s16, 0
    %p297 = por %p295, %p296
    %p298 = scmp.ne.s32.totalorder %s287, %s290
    %p299 = scmp.eq.s32.totalorder %s21, 1
    %p300 = por %p298, %p299
    %p301 = scmp.ne.s32.totalorder %s290, %s291
    %p302 = scmp.eq.s32.totalorder %s21, 0
    %p303 = por %p301, %p302
    %p304 = scmp.ne.s32.totalorder %s290, %s291
    %p305 = scmp.eq.s32.totalorder %s22, 1
    %p306 = por %p304, %p305
    %p308 = scmp.ne.s32.totalorder %s291, %s307
    %p309 = scmp.eq.s32.totalorder %s22, 0
    %p310 = por %p308, %p309
    %p311 = scmp.le.s32.totalorder 1, %s16
    %p312 = scmp.lt.s32.totalorder %s16, 3
    %p313 = pnand %p311, %p312
    %p314 = pneg %p313
    // Predicated region
    $region9: #{edge_predictor_forward.1} parent=5 // pred_check
      _
    $region10: #{edge_predictor_forward.1} parent=5 // pred_check_branch
      %316 = sbr.rel (%p313) target = $region12
    $region11: #{edge_predictor_forward.1} parent=5 // pred_region
      %s317 = ssub.s32 %s16, 1
      // Predicated region
      $region13: #{edge_predictor_forward.1} parent=11 // pred_check
        %p318 = pneg %p63
      $region14: #{edge_predictor_forward.1} parent=11 // pred_check_branch
        %320 = sbr.rel (%p318) target = $region16
      $region15: #{edge_predictor_forward.1} parent=11 // pred_region
        %s321 = smul.u32 16, %s27
        %p322 = scmp.lt.s32.totalorder %s321, 15
        %s323 = scalar_select %p322, %s321, 15
        %p324 = scmp.lt.s32.totalorder %s28, 0
        %s325 = scalar_select %p324, %s28, 0
        %s326 = sadd.s32 %s325, %s323
        %s327 = smul.addr %s326, 4
        %s328 = scalar_lea.vmem %s0, %s327
        %s329 = smul.u32 16, %s27
      $region16: #{edge_predictor_forward.1} parent=11 // pred_fallthru
        _
      // Predicated region
      $region17: #{edge_predictor_forward.1} parent=11 // pred_check
        %p330 = pneg %p89
      $region18: #{edge_predictor_forward.1} parent=11 // pred_check_branch
        %332 = sbr.rel (%p330) target = $region20
      $region19: #{edge_predictor_forward.1} parent=11 // pred_region
        %s333 = smul.u32 16, %s27
        %p334 = scmp.lt.s32.totalorder %s333, 15
        %s335 = scalar_select %p334, %s333, 15
        %s336 = smul.addr %s335, 8
        %s337 = scalar_lea.vmem %s1, %s336
        %s338 = smul.u32 16, %s27
      $region20: #{edge_predictor_forward.1} parent=11 // pred_fallthru
        _
      // Predicated region
      $region21: #{edge_predictor_forward.1} parent=11 // pred_check
        %p339 = pneg %p170
      $region22: #{edge_predictor_forward.1} parent=11 // pred_check_branch
        %341 = sbr.rel (%p339) target = $region24
      $region23: #{edge_predictor_forward.1} parent=11 // pred_region
        _
      $region24: #{edge_predictor_forward.1} parent=11 // pred_fallthru
        _
      // Predicated region
      $region25: #{edge_predictor_forward.1} parent=11 // pred_check
        %p342 = pneg %p191
      $region26: #{edge_predictor_forward.1} parent=11 // pred_check_branch
        %344 = sbr.rel (%p342) target = $region28
      $region27: #{edge_predictor_forward.1} parent=11 // pred_region
        _
      $region28: #{edge_predictor_forward.1} parent=11 // pred_fallthru
        _
      // Predicated region
      $region29: #{edge_predictor_forward.1} parent=11 // pred_check
        %p345 = pneg %p212
      $region30: #{edge_predictor_forward.1} parent=11 // pred_check_branch
        %347 = sbr.rel (%p345) target = $region32
      $region31: #{edge_predictor_forward.1} parent=11 // pred_region
        _
      $region32: #{edge_predictor_forward.1} parent=11 // pred_fallthru
        _
      // Predicated region
      $region33: #{edge_predictor_forward.1} parent=11 // pred_check
        %p348 = pneg %p233
      $region34: #{edge_predictor_forward.1} parent=11 // pred_check_branch
        %350 = sbr.rel (%p348) target = $region36
      $region35: #{edge_predictor_forward.1} parent=11 // pred_region
        _
      $region36: #{edge_predictor_forward.1} parent=11 // pred_fallthru
        _
      // Predicated region
      $region37: #{edge_predictor_forward.1} parent=11 // pred_check
        %p351 = pneg %p254
      $region38: #{edge_predictor_forward.1} parent=11 // pred_check_branch
        %353 = sbr.rel (%p351) target = $region40
      $region39: #{edge_predictor_forward.1} parent=11 // pred_region
        _
      $region40: #{edge_predictor_forward.1} parent=11 // pred_fallthru
        _
      // Predicated region
      $region41: #{edge_predictor_forward.1} parent=11 // pred_check
        %p354 = pneg %p275
      $region42: #{edge_predictor_forward.1} parent=11 // pred_check_branch
        %356 = sbr.rel (%p354) target = $region44
      $region43: #{edge_predictor_forward.1} parent=11 // pred_region
        _
      $region44: #{edge_predictor_forward.1} parent=11 // pred_fallthru
        _
    $region12: #{edge_predictor_forward.1} parent=5 // pred_fallthru
      _
    %p357 = scmp.lt.s32.totalorder %s16, 2
    // Predicated region
    $region45: #{edge_predictor_forward.1} parent=5 // pred_check
      %p358 = pneg %p357
    $region46: #{edge_predictor_forward.1} parent=5 // pred_check_branch
      %360 = sbr.rel (%p358) target = $region48
    $region47: #{edge_predictor_forward.1} parent=5 // pred_region
      // Predicated region
      $region49: #{edge_predictor_forward.1} parent=47 // pred_check
        %p361 = pneg %p113
      $region50: #{edge_predictor_forward.1} parent=47 // pred_check_branch
        %363 = sbr.rel (%p361) target = $region52
      $region51: #{edge_predictor_forward.1} parent=47 // pred_region
        %s364 = ssub.s32 1, %s23
        %s365 = smul.u32 %s25, %s364
        %s366 = smul.u32 16, %s365
        %p367 = scmp.lt.s32.totalorder %s366, 15
        %s368 = scalar_select %p367, %s366, 15
        %s369 = smul.addr %s368, 4
        %s370 = scalar_lea.vmem %s2, %s369
        %s371 = ssub.s32 1, %s23
        %s372 = smul.u32 %s25, %s371
        %s373 = smul.u32 16, %s372
      $region52: #{edge_predictor_forward.1} parent=47 // pred_fallthru
        _
      // Predicated region
      $region53: #{edge_predictor_forward.1} parent=47 // pred_check
        %p374 = pneg %p143
      $region54: #{edge_predictor_forward.1} parent=47 // pred_check_branch
        %376 = sbr.rel (%p374) target = $region56
      $region55: #{edge_predictor_forward.1} parent=47 // pred_region
        %s377 = ssub.s32 1, %s23
        %s378 = smul.u32 %s24, %s377
        %s379 = smul.u32 16, %s378
        %p380 = scmp.lt.s32.totalorder %s379, 15
        %s381 = scalar_select %p380, %s379, 15
        %s382 = smul.addr %s381, 4
        %s383 = scalar_lea.vmem %s3, %s382
        %s384 = ssub.s32 1, %s23
        %s385 = smul.u32 %s24, %s384
        %s386 = smul.u32 16, %s385
      $region56: #{edge_predictor_forward.1} parent=47 // pred_fallthru
        _
    $region48: #{edge_predictor_forward.1} parent=5 // pred_fallthru
      _
    %p387 = scmp.le.s32.totalorder 1, %s16
    %p388 = scmp.lt.s32.totalorder %s16, 3
    %p389 = pnand %p387, %p388
    %p390 = pneg %p389
    // Predicated region
    $region57: #{edge_predictor_forward.1} parent=5 // pred_check
      _
    $region58: #{edge_predictor_forward.1} parent=5 // pred_check_branch
      %392 = sbr.rel (%p389) target = $region60
    $region59: #{edge_predictor_forward.1} parent=5 // pred_region
      %s393 = ssub.s32 %s16, 1
      %s394 = smul.u32 16, %s27
      %p395 = scmp.lt.s32.totalorder %s394, 15
      %s396 = scalar_select %p395, %s394, 15
      %p397 = scmp.lt.s32.totalorder %s28, 0
      %s398 = scalar_select %p397, %s28, 0
      %s399 = sadd.s32 %s398, %s396
      %s400 = smul.addr %s399, 4
      %s401 = scalar_lea.vmem %s0, %s400
      %p402 = pneg %p63
      %p403 = pneg %p60
      %s404 = smul.u32 16, %s27
      %p405 = scmp.lt.s32.totalorder %s404, 15
      %s406 = scalar_select %p405, %s404, 15
      %s407 = smul.addr %s406, 8
      %s408 = scalar_lea.vmem %s1, %s407
      %p409 = pneg %p89
      %p410 = pneg %p86
      %s411 = ssub.s32 1, %s26
      %s412 = smul.u32 %s28, %s411
      %s413 = smul.u32 16, %s412
      %p414 = scmp.lt.s32.totalorder %s413, 15
      %s415 = scalar_select %p414, %s413, 15
      %s416 = smul.addr %s415, 4
      %s417 = scalar_lea.vmem %s2, %s416
      %p418 = pneg %p119
      %p419 = pneg %p116
      %s420 = ssub.s32 1, %s26
      %s421 = smul.u32 %s27, %s420
      %s422 = smul.u32 16, %s421
      %p423 = scmp.lt.s32.totalorder %s422, 15
      %s424 = scalar_select %p423, %s422, 15
      %s425 = smul.addr %s424, 4
      %s426 = scalar_lea.vmem %s3, %s425
      %p427 = pneg %p149
      %p428 = pneg %p146
      %p429 = pneg %p170
      %p430 = pneg %p167
      %p431 = pneg %p191
      %p432 = pneg %p188
      %p433 = pneg %p212
      %p434 = pneg %p209
      %p435 = pneg %p233
      %p436 = pneg %p230
      %p437 = pneg %p254
      %p438 = pneg %p251
      %p439 = pneg %p275
      %p440 = pneg %p272
      %p441 = pneg %p303
      %p442 = pneg %p300
      %s443 = smul.u32 %s27, %s26
      %s444 = smul.u32 16, %s443
      %p445 = scmp.lt.s32.totalorder %s444, 15
      %s446 = scalar_select %p445, %s444, 15
      %s447 = smul.addr %s446, 8
      %s448 = scalar_lea.vmem %s10, %s447
      %s449 = smul.u32 16, %s27
      %p450 = scmp.lt.s32.totalorder %s449, 15
      %s451 = scalar_select %p450, %s449, 15
      %p452 = scmp.lt.s32.totalorder %s28, 0
      %s453 = scalar_select %p452, %s28, 0
      %s454 = sadd.s32 %s453, %s451
      %s455 = smul.addr %s454, 4
      %s456 = scalar_lea.vmem %s0, %s455
      %s457 = smul.u32 16, %s27
      %s458 = smul.u32 16, %s27
      %p459 = scmp.lt.s32.totalorder %s458, 15
      %s460 = scalar_select %p459, %s458, 15
      %s461 = smul.addr %s460, 8
      %s462 = scalar_lea.vmem %s1, %s461
      %s463 = smul.u32 16, %s27
      %s464 = ssub.s32 1, %s26
      %s465 = smul.u32 %s28, %s464
      %s466 = smul.u32 16, %s465
      %p467 = scmp.lt.s32.totalorder %s466, 15
      %s468 = scalar_select %p467, %s466, 15
      %s469 = smul.addr %s468, 4
      %s470 = scalar_lea.vmem %s2, %s469
      %s471 = ssub.s32 1, %s26
      %s472 = smul.u32 %s28, %s471
      %s473 = smul.u32 16, %s472
      %s474 = ssub.s32 1, %s26
      %s475 = smul.u32 %s27, %s474
      %s476 = smul.u32 16, %s475
      %p477 = scmp.lt.s32.totalorder %s476, 15
      %s478 = scalar_select %p477, %s476, 15
      %s479 = smul.addr %s478, 4
      %s480 = scalar_lea.vmem %s3, %s479
      %s481 = ssub.s32 1, %s26
      %s482 = smul.u32 %s27, %s481
      %s483 = smul.u32 16, %s482
      %s484 = smul.u32 %s27, %s26
      %s485 = smul.u32 16, %s484
      %p486 = scmp.lt.s32.totalorder %s485, 15
      %s487 = scalar_select %p486, %s485, 15
      %s488 = smul.addr %s487, 8
      %s489 = scalar_lea.vmem %s10, %s488
      %s490 = smul.u32 %s27, %s26
      %s491 = smul.u32 16, %s490
      %v493 = vld [vmem:[%s456] sm:$0xf]
      %v494 = vld [vmem:[%s456 + $0x4] sm:$0xf]
      %v495 = vld [vmem:[%s456 + $0x8] sm:$0xf]
      %v496 = vld [vmem:[%s456 + $0xc] sm:$0xf]
      %v497 = vld [vmem:[%s456 + $0x10] sm:$0xf]
      %v498 = vld [vmem:[%s456 + $0x14] sm:$0xf]
      %v499 = vld [vmem:[%s456 + $0x18] sm:$0xf]
      %v500 = vld [vmem:[%s456 + $0x1c] sm:$0xf]
      %v501 = vld [vmem:[%s456 + $0x20] sm:$0xf]
      %v502 = vld [vmem:[%s456 + $0x24] sm:$0xf]
      %v503 = vld [vmem:[%s456 + $0x28] sm:$0xf]
      %v504 = vld [vmem:[%s456 + $0x2c] sm:$0xf]
      %v505 = vld [vmem:[%s456 + $0x30] sm:$0xf]
      %v506 = vld [vmem:[%s456 + $0x34] sm:$0xf]
      %v507 = vld [vmem:[%s456 + $0x38] sm:$0xf]
      %v508 = vld [vmem:[%s456 + $0x3c] sm:$0xf]
      %p509 = scmp.eq.s32.totalorder %s26, 0
      // Predicated region
      $region61: #{edge_predictor_forward.1} parent=59 // pred_check
        %p510 = pneg %p509
      $region62: #{edge_predictor_forward.1} parent=59 // pred_check_branch
        %512 = sbr.rel (%p510) target = $region64
      $region63: #{edge_predictor_forward.1} parent=59 // pred_region
        %p513 = scmp.eq.s32.totalorder %s28, 0
        // Predicated region
        $region65: #{edge_predictor_forward.1} parent=63 // pred_check
          %p514 = pneg %p513
        $region66: #{edge_predictor_forward.1} parent=63 // pred_check_branch
          %516 = sbr.rel (%p514) target = $region68
        $region67: #{edge_predictor_forward.1} parent=63 // pred_region
          %517 = vst [vmem:[#allocation2] sm:$0xff] 0.0
          %518 = vst [vmem:[#allocation2 + $0x8] sm:$0xff] 0.0
          %519 = vst [vmem:[#allocation2 + $0x10] sm:$0xff] 0.0
          %520 = vst [vmem:[#allocation2 + $0x18] sm:$0xff] 0.0
          %521 = vst [vmem:[#allocation2 + $0x20] sm:$0xff] 0.0
          %522 = vst [vmem:[#allocation2 + $0x28] sm:$0xff] 0.0
          %523 = vst [vmem:[#allocation2 + $0x30] sm:$0xff] 0.0
          %524 = vst [vmem:[#allocation2 + $0x38] sm:$0xff] 0.0
          %525 = vst [vmem:[#allocation2 + $0x40] sm:$0xff] 0.0
          %526 = vst [vmem:[#allocation2 + $0x48] sm:$0xff] 0.0
          %527 = vst [vmem:[#allocation2 + $0x50] sm:$0xff] 0.0
          %528 = vst [vmem:[#allocation2 + $0x58] sm:$0xff] 0.0
          %529 = vst [vmem:[#allocation2 + $0x60] sm:$0xff] 0.0
          %530 = vst [vmem:[#allocation2 + $0x68] sm:$0xff] 0.0
          %531 = vst [vmem:[#allocation2 + $0x70] sm:$0xff] 0.0
          %532 = vst [vmem:[#allocation2 + $0x78] sm:$0xff] 0.0
        $region68: #{edge_predictor_forward.1} parent=63 // pred_fallthru
          _
        %v533 = vld [vmem:[#allocation2] sm:$0xff]
        %v534 = vld [vmem:[#allocation2 + $0x8] sm:$0xff]
        %v535 = vld [vmem:[#allocation2 + $0x10] sm:$0xff]
        %v536 = vld [vmem:[#allocation2 + $0x18] sm:$0xff]
        %v537 = vld [vmem:[#allocation2 + $0x20] sm:$0xff]
        %v538 = vld [vmem:[#allocation2 + $0x28] sm:$0xff]
        %v539 = vld [vmem:[#allocation2 + $0x30] sm:$0xff]
        %v540 = vld [vmem:[#allocation2 + $0x38] sm:$0xff]
        %v541 = vld [vmem:[#allocation2 + $0x40] sm:$0xff]
        %v542 = vld [vmem:[#allocation2 + $0x48] sm:$0xff]
        %v543 = vld [vmem:[#allocation2 + $0x50] sm:$0xff]
        %v544 = vld [vmem:[#allocation2 + $0x58] sm:$0xff]
        %v545 = vld [vmem:[#allocation2 + $0x60] sm:$0xff]
        %v546 = vld [vmem:[#allocation2 + $0x68] sm:$0xff]
        %v547 = vld [vmem:[#allocation2 + $0x70] sm:$0xff]
        %v548 = vld [vmem:[#allocation2 + $0x78] sm:$0xff]
        %v549 = vld [vmem:[%s470] sm:$0xf]
        %v550 = vld [vmem:[%s470 + $0x4] sm:$0xf]
        %v551 = vld [vmem:[%s470 + $0x8] sm:$0xf]
        %v552 = vld [vmem:[%s470 + $0xc] sm:$0xf]
        %v553 = vld [vmem:[%s470 + $0x10] sm:$0xf]
        %v554 = vld [vmem:[%s470 + $0x14] sm:$0xf]
        %v555 = vld [vmem:[%s470 + $0x18] sm:$0xf]
        %v556 = vld [vmem:[%s470 + $0x1c] sm:$0xf]
        %v557 = vld [vmem:[%s470 + $0x20] sm:$0xf]
        %v558 = vld [vmem:[%s470 + $0x24] sm:$0xf]
        %v559 = vld [vmem:[%s470 + $0x28] sm:$0xf]
        %v560 = vld [vmem:[%s470 + $0x2c] sm:$0xf]
        %v561 = vld [vmem:[%s470 + $0x30] sm:$0xf]
        %v562 = vld [vmem:[%s470 + $0x34] sm:$0xf]
        %v563 = vld [vmem:[%s470 + $0x38] sm:$0xf]
        %v564 = vld [vmem:[%s470 + $0x3c] sm:$0xf]
        %v581 = vunpack.c.l.b16 %v493
        %v582 = vunpack.c.l.b16 %v494
        %v583 = vunpack.c.l.b16 %v495
        %v584 = vunpack.c.l.b16 %v496
        %v585 = vunpack.c.l.b16 %v497
        %v586 = vunpack.c.l.b16 %v498
        %v587 = vunpack.c.l.b16 %v499
        %v588 = vunpack.c.l.b16 %v500
        %v589 = vunpack.c.l.b16 %v501
        %v590 = vunpack.c.l.b16 %v502
        %v591 = vunpack.c.l.b16 %v503
        %v592 = vunpack.c.l.b16 %v504
        %v593 = vunpack.c.l.b16 %v505
        %v594 = vunpack.c.l.b16 %v506
        %v595 = vunpack.c.l.b16 %v507
        %v596 = vunpack.c.l.b16 %v508
        %v597 = vpack.c.b16 %v582, %v581
        %v598 = vpack.c.b16 %v584, %v583
        %v599 = vpack.c.b16 %v586, %v585
        %v600 = vpack.c.b16 %v588, %v587
        %v601 = vpack.c.b16 %v590, %v589
        %v602 = vpack.c.b16 %v592, %v591
        %v603 = vpack.c.b16 %v594, %v593
        %v604 = vpack.c.b16 %v596, %v595
        %v629 = vunpack.c.l.b16 %v549
        %v630 = vunpack.c.l.b16 %v550
        %v631 = vunpack.c.l.b16 %v551
        %v632 = vunpack.c.l.b16 %v552
        %v633 = vunpack.c.l.b16 %v553
        %v634 = vunpack.c.l.b16 %v554
        %v635 = vunpack.c.l.b16 %v555
        %v636 = vunpack.c.l.b16 %v556
        %v637 = vunpack.c.l.b16 %v557
        %v638 = vunpack.c.l.b16 %v558
        %v639 = vunpack.c.l.b16 %v559
        %v640 = vunpack.c.l.b16 %v560
        %v641 = vunpack.c.l.b16 %v561
        %v642 = vunpack.c.l.b16 %v562
        %v643 = vunpack.c.l.b16 %v563
        %v644 = vunpack.c.l.b16 %v564
        %v645 = vpack.c.b16 %v630, %v629
        %v646 = vpack.c.b16 %v632, %v631
        %v647 = vpack.c.b16 %v634, %v633
        %v648 = vpack.c.b16 %v636, %v635
        %v649 = vpack.c.b16 %v638, %v637
        %v650 = vpack.c.b16 %v640, %v639
        %v651 = vpack.c.b16 %v642, %v641
        %v652 = vpack.c.b16 %v644, %v643
        %661 = vmatprep.subr.bf16.mxu0 0
        %662 = vmatpush1.bf16.msra.mxu0 %v645
        %663 = vmatprep.subr.bf16.mxu0 0
        %664 = vmatpush1.bf16.msra.mxu0 %v646
        %665 = vmatprep.subr.bf16.mxu0 0
        %666 = vmatpush1.bf16.msra.mxu0 %v647
        %667 = vmatprep.subr.bf16.mxu0 0
        %668 = vmatpush1.bf16.msra.mxu0 %v648
        %669 = vmatprep.subr.bf16.mxu0 0
        %670 = vmatpush1.bf16.msra.mxu0 %v649
        %671 = vmatprep.subr.bf16.mxu0 0
        %672 = vmatpush1.bf16.msra.mxu0 %v650
        %673 = vmatprep.subr.bf16.mxu0 0
        %674 = vmatpush1.bf16.msra.mxu0 %v651
        %675 = vmatprep.subr.bf16.mxu0 0
        %676 = vmatpush1.bf16.msra.mxu0 %v652
        %677 = vmatprep.subr.bf16.mxu0 0
        %678 = vmatpush1.bf16.msra.mxu0 0
        %679 = vmatprep.subr.bf16.mxu0 0
        %680 = vmatpush1.bf16.msra.mxu0 0
        %681 = vmatprep.subr.bf16.mxu0 0
        %682 = vmatpush1.bf16.msra.mxu0 0
        %683 = vmatprep.subr.bf16.mxu0 0
        %684 = vmatpush1.bf16.msra.mxu0 0
        %685 = vmatprep.subr.bf16.mxu0 0
        %686 = vmatpush1.bf16.msra.mxu0 0
        %687 = vmatprep.subr.bf16.mxu0 0
        %688 = vmatpush1.bf16.msra.mxu0 0
        %689 = vmatprep.subr.bf16.mxu0 0
        %690 = vmatpush1.bf16.msra.mxu0 0
        %691 = vmatprep.subr.bf16.mxu0 0
        %692 = vmatpush1.bf16.msra.mxu0 0
        %693 = vmatprep.mubr.bf16.mxu0 0
        %694 = vmatmul.mubr.bf16.gmra.mrb[0].mxu0 %v597
        %v695 = vpop.f32.mrb[0].mxu0
        %v696 = vadd.f32 0.0, %v695
        %v697 = vpop.f32.mrb[0].mxu0
        %v698 = vpop.f32.mrb[0].mxu0
        %v699 = vadd.f32 0.0, %v698
        %v700 = vpop.f32.mrb[0].mxu0
        %701 = vmatprep.mubr.bf16.mxu0 0
        %702 = vmatmul.mubr.bf16.gmra.mrb[0].mxu0 %v598
        %v703 = vpop.f32.mrb[0].mxu0
        %v704 = vadd.f32 0.0, %v703
        %v705 = vpop.f32.mrb[0].mxu0
        %v706 = vpop.f32.mrb[0].mxu0
        %v707 = vadd.f32 0.0, %v706
        %v708 = vpop.f32.mrb[0].mxu0
        %709 = vmatprep.mubr.bf16.mxu0 0
        %710 = vmatmul.mubr.bf16.gmra.mrb[0].mxu0 %v599
        %v711 = vpop.f32.mrb[0].mxu0
        %v712 = vadd.f32 0.0, %v711
        %v713 = vpop.f32.mrb[0].mxu0
        %v714 = vpop.f32.mrb[0].mxu0
        %v715 = vadd.f32 0.0, %v714
        %v716 = vpop.f32.mrb[0].mxu0
        %717 = vmatprep.mubr.bf16.mxu0 0
        %718 = vmatmul.mubr.bf16.gmra.mrb[0].mxu0 %v600
        %v719 = vpop.f32.mrb[0].mxu0
        %v720 = vadd.f32 0.0, %v719
        %v721 = vpop.f32.mrb[0].mxu0
        %v722 = vpop.f32.mrb[0].mxu0
        %v723 = vadd.f32 0.0, %v722
        %v724 = vpop.f32.mrb[0].mxu0
        %725 = vmatprep.mubr.bf16.mxu0 0
        %726 = vmatmul.mubr.bf16.gmra.mrb[0].mxu0 %v601
        %v727 = vpop.f32.mrb[0].mxu0
        %v728 = vadd.f32 0.0, %v727
        %v729 = vpop.f32.mrb[0].mxu0
        %v730 = vpop.f32.mrb[0].mxu0
        %v731 = vadd.f32 0.0, %v730
        %v732 = vpop.f32.mrb[0].mxu0
        %733 = vmatprep.mubr.bf16.mxu0 0
        %734 = vmatmul.mubr.bf16.gmra.mrb[0].mxu0 %v602
        %v735 = vpop.f32.mrb[0].mxu0
        %v736 = vadd.f32 0.0, %v735
        %v737 = vpop.f32.mrb[0].mxu0
        %v738 = vpop.f32.mrb[0].mxu0
        %v739 = vadd.f32 0.0, %v738
        %v740 = vpop.f32.mrb[0].mxu0
        %741 = vmatprep.mubr.bf16.mxu0 0
        %742 = vmatmul.mubr.bf16.gmra.mrb[0].mxu0 %v603
        %v743 = vpop.f32.mrb[0].mxu0
        %v744 = vadd.f32 0.0, %v743
        %v745 = vpop.f32.mrb[0].mxu0
        %v746 = vpop.f32.mrb[0].mxu0
        %v747 = vadd.f32 0.0, %v746
        %v748 = vpop.f32.mrb[0].mxu0
        %749 = vmatprep.mubr.bf16.mxu0 0
        %750 = vmatmul.mubr.bf16.gmra.mrb[0].mxu0 %v604
        %v751 = vpop.f32.mrb[0].mxu0
        %v752 = vadd.f32 0.0, %v751
        %v753 = vpop.f32.mrb[0].mxu0
        %v754 = vpop.f32.mrb[0].mxu0
        %v755 = vadd.f32 0.0, %v754
        %v756 = vpop.f32.mrb[0].mxu0
        %757 = vdwg.mxu0
        %v758 = vadd.f32 %v533, %v696
        %v759 = vadd.f32 %v534, %v699
        %v760 = vadd.f32 %v535, %v704
        %v761 = vadd.f32 %v536, %v707
        %v762 = vadd.f32 %v537, %v712
        %v763 = vadd.f32 %v538, %v715
        %v764 = vadd.f32 %v539, %v720
        %v765 = vadd.f32 %v540, %v723
        %v766 = vadd.f32 %v541, %v728
        %v767 = vadd.f32 %v542, %v731
        %v768 = vadd.f32 %v543, %v736
        %v769 = vadd.f32 %v544, %v739
        %v770 = vadd.f32 %v545, %v744
        %v771 = vadd.f32 %v546, %v747
        %v772 = vadd.f32 %v547, %v752
        %v773 = vadd.f32 %v548, %v755
        %774 = vst [vmem:[#allocation2] sm:$0xff] %v758
        %775 = vst [vmem:[#allocation2 + $0x8] sm:$0xff] %v759
        %776 = vst [vmem:[#allocation2 + $0x10] sm:$0xff] %v760
        %777 = vst [vmem:[#allocation2 + $0x18] sm:$0xff] %v761
        %778 = vst [vmem:[#allocation2 + $0x20] sm:$0xff] %v762
        %779 = vst [vmem:[#allocation2 + $0x28] sm:$0xff] %v763
        %780 = vst [vmem:[#allocation2 + $0x30] sm:$0xff] %v764
        %781 = vst [vmem:[#allocation2 + $0x38] sm:$0xff] %v765
        %782 = vst [vmem:[#allocation2 + $0x40] sm:$0xff] %v766
        %783 = vst [vmem:[#allocation2 + $0x48] sm:$0xff] %v767
        %784 = vst [vmem:[#allocation2 + $0x50] sm:$0xff] %v768
        %785 = vst [vmem:[#allocation2 + $0x58] sm:$0xff] %v769
        %786 = vst [vmem:[#allocation2 + $0x60] sm:$0xff] %v770
        %787 = vst [vmem:[#allocation2 + $0x68] sm:$0xff] %v771
        %788 = vst [vmem:[#allocation2 + $0x70] sm:$0xff] %v772
        %789 = vst [vmem:[#allocation2 + $0x78] sm:$0xff] %v773
        // Predicated region
        $region69: #{edge_predictor_forward.1} parent=63 // pred_check
          %p790 = pneg %p513
        $region70: #{edge_predictor_forward.1} parent=63 // pred_check_branch
          %792 = sbr.rel (%p790) target = $region72
        $region71: #{edge_predictor_forward.1} parent=63 // pred_region
          %v793 = vld [vmem:[%s462] sm:$0xff]
          %v794 = vld [vmem:[%s462 + $0x8] sm:$0xff]
          %v795 = vld [vmem:[%s462 + $0x10] sm:$0xff]
          %v796 = vld [vmem:[%s462 + $0x18] sm:$0xff]
          %v797 = vld [vmem:[%s462 + $0x20] sm:$0xff]
          %v798 = vld [vmem:[%s462 + $0x28] sm:$0xff]
          %v799 = vld [vmem:[%s462 + $0x30] sm:$0xff]
          %v800 = vld [vmem:[%s462 + $0x38] sm:$0xff]
          %v801 = vld [vmem:[%s462 + $0x40] sm:$0xff]
          %v802 = vld [vmem:[%s462 + $0x48] sm:$0xff]
          %v803 = vld [vmem:[%s462 + $0x50] sm:$0xff]
          %v804 = vld [vmem:[%s462 + $0x58] sm:$0xff]
          %v805 = vld [vmem:[%s462 + $0x60] sm:$0xff]
          %v806 = vld [vmem:[%s462 + $0x68] sm:$0xff]
          %v807 = vld [vmem:[%s462 + $0x70] sm:$0xff]
          %v808 = vld [vmem:[%s462 + $0x78] sm:$0xff]
          %v809 = vrcp.pop %v793
          %v810 = vrcp.pop %v794
          %v811 = vrcp.pop %v795
          %v812 = vrcp.pop %v796
          %v813 = vrcp.pop %v797
          %v814 = vrcp.pop %v798
          %v815 = vrcp.pop %v799
          %v816 = vrcp.pop %v800
          %v817 = vrcp.pop %v801
          %v818 = vrcp.pop %v802
          %v819 = vrcp.pop %v803
          %v820 = vrcp.pop %v804
          %v821 = vrcp.pop %v805
          %v822 = vrcp.pop %v806
          %v823 = vrcp.pop %v807
          %v824 = vrcp.pop %v808
          %v825 = vld [vmem:[#allocation2] sm:$0xff]
          %v826 = vld [vmem:[#allocation2 + $0x8] sm:$0xff]
          %v827 = vld [vmem:[#allocation2 + $0x10] sm:$0xff]
          %v828 = vld [vmem:[#allocation2 + $0x18] sm:$0xff]
          %v829 = vld [vmem:[#allocation2 + $0x20] sm:$0xff]
          %v830 = vld [vmem:[#allocation2 + $0x28] sm:$0xff]
          %v831 = vld [vmem:[#allocation2 + $0x30] sm:$0xff]
          %v832 = vld [vmem:[#allocation2 + $0x38] sm:$0xff]
          %v833 = vld [vmem:[#allocation2 + $0x40] sm:$0xff]
          %v834 = vld [vmem:[#allocation2 + $0x48] sm:$0xff]
          %v835 = vld [vmem:[#allocation2 + $0x50] sm:$0xff]
          %v836 = vld [vmem:[#allocation2 + $0x58] sm:$0xff]
          %v837 = vld [vmem:[#allocation2 + $0x60] sm:$0xff]
          %v838 = vld [vmem:[#allocation2 + $0x68] sm:$0xff]
          %v839 = vld [vmem:[#allocation2 + $0x70] sm:$0xff]
          %v840 = vld [vmem:[#allocation2 + $0x78] sm:$0xff]
          %842 = vset.pattern.permute.xlu0 0
          %843 = vperm.xlu0 %842, %v809
          %v844 = vpop.permute.xlu0 %843
          %847 = vset.pattern.permute.xlu0 0
          %848 = vperm.xlu0 %847, %v810
          %v849 = vpop.permute.xlu0 %848
          %852 = vset.pattern.permute.xlu0 0
          %853 = vperm.xlu0 %852, %v811
          %v854 = vpop.permute.xlu0 %853
          %857 = vset.pattern.permute.xlu0 0
          %858 = vperm.xlu0 %857, %v812
          %v859 = vpop.permute.xlu0 %858
          %862 = vset.pattern.permute.xlu0 0
          %863 = vperm.xlu0 %862, %v813
          %v864 = vpop.permute.xlu0 %863
          %867 = vset.pattern.permute.xlu0 0
          %868 = vperm.xlu0 %867, %v814
          %v869 = vpop.permute.xlu0 %868
          %872 = vset.pattern.permute.xlu0 0
          %873 = vperm.xlu0 %872, %v815
          %v874 = vpop.permute.xlu0 %873
          %877 = vset.pattern.permute.xlu0 0
          %878 = vperm.xlu0 %877, %v816
          %v879 = vpop.permute.xlu0 %878
          %882 = vset.pattern.permute.xlu0 0
          %883 = vperm.xlu0 %882, %v817
          %v884 = vpop.permute.xlu0 %883
          %887 = vset.pattern.permute.xlu0 0
          %888 = vperm.xlu0 %887, %v818
          %v889 = vpop.permute.xlu0 %888
          %892 = vset.pattern.permute.xlu0 0
          %893 = vperm.xlu0 %892, %v819
          %v894 = vpop.permute.xlu0 %893
          %897 = vset.pattern.permute.xlu0 0
          %898 = vperm.xlu0 %897, %v820
          %v899 = vpop.permute.xlu0 %898
          %902 = vset.pattern.permute.xlu0 0
          %903 = vperm.xlu0 %902, %v821
          %v904 = vpop.permute.xlu0 %903
          %907 = vset.pattern.permute.xlu0 0
          %908 = vperm.xlu0 %907, %v822
          %v909 = vpop.permute.xlu0 %908
          %912 = vset.pattern.permute.xlu0 0
          %913 = vperm.xlu0 %912, %v823
          %v914 = vpop.permute.xlu0 %913
          %917 = vset.pattern.permute.xlu0 0
          %918 = vperm.xlu0 %917, %v824
          %v919 = vpop.permute.xlu0 %918
          %v921 = vmul.f32 %v825, %v844
          %v922 = vmul.f32 %v826, %v849
          %v923 = vmul.f32 %v827, %v854
          %v924 = vmul.f32 %v828, %v859
          %v925 = vmul.f32 %v829, %v864
          %v926 = vmul.f32 %v830, %v869
          %v927 = vmul.f32 %v831, %v874
          %v928 = vmul.f32 %v832, %v879
          %v929 = vmul.f32 %v833, %v884
          %v930 = vmul.f32 %v834, %v889
          %v931 = vmul.f32 %v835, %v894
          %v932 = vmul.f32 %v836, %v899
          %v933 = vmul.f32 %v837, %v904
          %v934 = vmul.f32 %v838, %v909
          %v935 = vmul.f32 %v839, %v914
          %v936 = vmul.f32 %v840, %v919
          %v937 = vpack.c.bf16 %v922, %v921
          %v938 = vpack.c.bf16 %v924, %v923
          %v939 = vpack.c.bf16 %v926, %v925
          %v940 = vpack.c.bf16 %v928, %v927
          %v941 = vpack.c.bf16 %v930, %v929
          %v942 = vpack.c.bf16 %v932, %v931
          %v943 = vpack.c.bf16 %v934, %v933
          %v944 = vpack.c.bf16 %v936, %v935
          %v945 = vld [vmem:[%s4] sm:$0xf]
          %v946 = vld [vmem:[%s4 + $0x4] sm:$0xf]
          %v947 = vld [vmem:[%s4 + $0x8] sm:$0xf]
          %v948 = vld [vmem:[%s4 + $0xc] sm:$0xf]
          %v949 = vld [vmem:[%s4 + $0x10] sm:$0xf]
          %v950 = vld [vmem:[%s4 + $0x14] sm:$0xf]
          %v951 = vld [vmem:[%s4 + $0x18] sm:$0xf]
          %v952 = vld [vmem:[%s4 + $0x1c] sm:$0xf]
          %v953 = vld [vmem:[%s4 + $0x20] sm:$0xf]
          %v954 = vld [vmem:[%s4 + $0x24] sm:$0xf]
          %v955 = vld [vmem:[%s4 + $0x28] sm:$0xf]
          %v956 = vld [vmem:[%s4 + $0x2c] sm:$0xf]
          %v957 = vld [vmem:[%s4 + $0x30] sm:$0xf]
          %v958 = vld [vmem:[%s4 + $0x34] sm:$0xf]
          %v959 = vld [vmem:[%s4 + $0x38] sm:$0xf]
          %v960 = vld [vmem:[%s4 + $0x3c] sm:$0xf]
          %v961 = vld [vmem:[%s480] sm:$0xf]
          %v962 = vld [vmem:[%s480 + $0x4] sm:$0xf]
          %v963 = vld [vmem:[%s480 + $0x8] sm:$0xf]
          %v964 = vld [vmem:[%s480 + $0xc] sm:$0xf]
          %v965 = vld [vmem:[%s480 + $0x10] sm:$0xf]
          %v966 = vld [vmem:[%s480 + $0x14] sm:$0xf]
          %v967 = vld [vmem:[%s480 + $0x18] sm:$0xf]
          %v968 = vld [vmem:[%s480 + $0x1c] sm:$0xf]
          %v969 = vld [vmem:[%s480 + $0x20] sm:$0xf]
          %v970 = vld [vmem:[%s480 + $0x24] sm:$0xf]
          %v971 = vld [vmem:[%s480 + $0x28] sm:$0xf]
          %v972 = vld [vmem:[%s480 + $0x2c] sm:$0xf]
          %v973 = vld [vmem:[%s480 + $0x30] sm:$0xf]
          %v974 = vld [vmem:[%s480 + $0x34] sm:$0xf]
          %v975 = vld [vmem:[%s480 + $0x38] sm:$0xf]
          %v976 = vld [vmem:[%s480 + $0x3c] sm:$0xf]
          %v977 = vld [vmem:[%s5] sm:$0xf]
          %v978 = vld [vmem:[%s5 + $0x4] sm:$0xf]
          %v979 = vld [vmem:[%s5 + $0x8] sm:$0xf]
          %v980 = vld [vmem:[%s5 + $0xc] sm:$0xf]
          %v981 = vld [vmem:[%s5 + $0x10] sm:$0xf]
          %v982 = vld [vmem:[%s5 + $0x14] sm:$0xf]
          %v983 = vld [vmem:[%s5 + $0x18] sm:$0xf]
          %v984 = vld [vmem:[%s5 + $0x1c] sm:$0xf]
          %v985 = vld [vmem:[%s5 + $0x20] sm:$0xf]
          %v986 = vld [vmem:[%s5 + $0x24] sm:$0xf]
          %v987 = vld [vmem:[%s5 + $0x28] sm:$0xf]
          %v988 = vld [vmem:[%s5 + $0x2c] sm:$0xf]
          %v989 = vld [vmem:[%s5 + $0x30] sm:$0xf]
          %v990 = vld [vmem:[%s5 + $0x34] sm:$0xf]
          %v991 = vld [vmem:[%s5 + $0x38] sm:$0xf]
          %v992 = vld [vmem:[%s5 + $0x3c] sm:$0xf]
          %v1009 = vunpack.c.l.b16 %v961
          %v1010 = vunpack.c.l.b16 %v962
          %v1011 = vunpack.c.l.b16 %v963
          %v1012 = vunpack.c.l.b16 %v964
          %v1013 = vunpack.c.l.b16 %v965
          %v1014 = vunpack.c.l.b16 %v966
          %v1015 = vunpack.c.l.b16 %v967
          %v1016 = vunpack.c.l.b16 %v968
          %v1017 = vunpack.c.l.b16 %v969
          %v1018 = vunpack.c.l.b16 %v970
          %v1019 = vunpack.c.l.b16 %v971
          %v1020 = vunpack.c.l.b16 %v972
          %v1021 = vunpack.c.l.b16 %v973
          %v1022 = vunpack.c.l.b16 %v974
          %v1023 = vunpack.c.l.b16 %v975
          %v1024 = vunpack.c.l.b16 %v976
          %v1025 = vpack.c.b16 %v1010, %v1009
          %v1026 = vpack.c.b16 %v1012, %v1011
          %v1027 = vpack.c.b16 %v1014, %v1013
          %v1028 = vpack.c.b16 %v1016, %v1015
          %v1029 = vpack.c.b16 %v1018, %v1017
          %v1030 = vpack.c.b16 %v1020, %v1019
          %v1031 = vpack.c.b16 %v1022, %v1021
          %v1032 = vpack.c.b16 %v1024, %v1023
          %v1057 = vunpack.c.l.b16 %v977
          %v1058 = vunpack.c.l.b16 %v978
          %v1059 = vunpack.c.l.b16 %v979
          %v1060 = vunpack.c.l.b16 %v980
          %v1061 = vunpack.c.l.b16 %v981
          %v1062 = vunpack.c.l.b16 %v982
          %v1063 = vunpack.c.l.b16 %v983
          %v1064 = vunpack.c.l.b16 %v984
          %v1065 = vunpack.c.l.b16 %v985
          %v1066 = vunpack.c.l.b16 %v986
          %v1067 = vunpack.c.l.b16 %v987
          %v1068 = vunpack.c.l.b16 %v988
          %v1069 = vunpack.c.l.b16 %v989
          %v1070 = vunpack.c.l.b16 %v990
          %v1071 = vunpack.c.l.b16 %v991
          %v1072 = vunpack.c.l.b16 %v992
          %v1073 = vpack.c.b16 %v1058, %v1057
          %v1074 = vpack.c.b16 %v1060, %v1059
          %v1075 = vpack.c.b16 %v1062, %v1061
          %v1076 = vpack.c.b16 %v1064, %v1063
          %v1077 = vpack.c.b16 %v1066, %v1065
          %v1078 = vpack.c.b16 %v1068, %v1067
          %v1079 = vpack.c.b16 %v1070, %v1069
          %v1080 = vpack.c.b16 %v1072, %v1071
          %1089 = vmatprep.subr.bf16.mxu0 0
          %1090 = vmatpush1.bf16.msra.mxu0 %v1073
          %1091 = vmatprep.subr.bf16.mxu0 0
          %1092 = vmatpush1.bf16.msra.mxu0 %v1074
          %1093 = vmatprep.subr.bf16.mxu0 0
          %1094 = vmatpush1.bf16.msra.mxu0 %v1075
          %1095 = vmatprep.subr.bf16.mxu0 0
          %1096 = vmatpush1.bf16.msra.mxu0 %v1076
          %1097 = vmatprep.subr.bf16.mxu0 0
          %1098 = vmatpush1.bf16.msra.mxu0 %v1077
          %1099 = vmatprep.subr.bf16.mxu0 0
          %1100 = vmatpush1.bf16.msra.mxu0 %v1078
          %1101 = vmatprep.subr.bf16.mxu0 0
          %1102 = vmatpush1.bf16.msra.mxu0 %v1079
          %1103 = vmatprep.subr.bf16.mxu0 0
          %1104 = vmatpush1.bf16.msra.mxu0 %v1080
          %1105 = vmatprep.subr.bf16.mxu0 0
          %1106 = vmatpush1.bf16.msra.mxu0 0
          %1107 = vmatprep.subr.bf16.mxu0 0
          %1108 = vmatpush1.bf16.msra.mxu0 0
          %1109 = vmatprep.subr.bf16.mxu0 0
          %1110 = vmatpush1.bf16.msra.mxu0 0
          %1111 = vmatprep.subr.bf16.mxu0 0
          %1112 = vmatpush1.bf16.msra.mxu0 0
          %1113 = vmatprep.subr.bf16.mxu0 0
          %1114 = vmatpush1.bf16.msra.mxu0 0
          %1115 = vmatprep.subr.bf16.mxu0 0
          %1116 = vmatpush1.bf16.msra.mxu0 0
          %1117 = vmatprep.subr.bf16.mxu0 0
          %1118 = vmatpush1.bf16.msra.mxu0 0
          %1119 = vmatprep.subr.bf16.mxu0 0
          %1120 = vmatpush1.bf16.msra.mxu0 0
          %1121 = vmatprep.mubr.bf16.mxu0 0
          %1122 = vmatmul.mubr.bf16.gmra.mrb[0].mxu0 %v1025
          %v1123 = vpop.f32.mrb[0].mxu0
          %v1124 = vadd.f32 0.0, %v1123
          %v1125 = vpop.f32.mrb[0].mxu0
          %v1126 = vpop.f32.mrb[0].mxu0
          %v1127 = vadd.f32 0.0, %v1126
          %v1128 = vpop.f32.mrb[0].mxu0
          %1129 = vmatprep.mubr.bf16.mxu0 0
          %1130 = vmatmul.mubr.bf16.gmra.mrb[0].mxu0 %v1026
          %v1131 = vpop.f32.mrb[0].mxu0
          %v1132 = vadd.f32 0.0, %v1131
          %v1133 = vpop.f32.mrb[0].mxu0
          %v1134 = vpop.f32.mrb[0].mxu0
          %v1135 = vadd.f32 0.0, %v1134
          %v1136 = vpop.f32.mrb[0].mxu0
          %1137 = vmatprep.mubr.bf16.mxu0 0
          %1138 = vmatmul.mubr.bf16.gmra.mrb[0].mxu0 %v1027
          %v1139 = vpop.f32.mrb[0].mxu0
          %v1140 = vadd.f32 0.0, %v1139
          %v1141 = vpop.f32.mrb[0].mxu0
          %v1142 = vpop.f32.mrb[0].mxu0
          %v1143 = vadd.f32 0.0, %v1142
          %v1144 = vpop.f32.mrb[0].mxu0
          %1145 = vmatprep.mubr.bf16.mxu0 0
          %1146 = vmatmul.mubr.bf16.gmra.mrb[0].mxu0 %v1028
          %v1147 = vpop.f32.mrb[0].mxu0
          %v1148 = vadd.f32 0.0, %v1147
          %v1149 = vpop.f32.mrb[0].mxu0
          %v1150 = vpop.f32.mrb[0].mxu0
          %v1151 = vadd.f32 0.0, %v1150
          %v1152 = vpop.f32.mrb[0].mxu0
          %1153 = vmatprep.mubr.bf16.mxu0 0
          %1154 = vmatmul.mubr.bf16.gmra.mrb[0].mxu0 %v1029
          %v1155 = vpop.f32.mrb[0].mxu0
          %v1156 = vadd.f32 0.0, %v1155
          %v1157 = vpop.f32.mrb[0].mxu0
          %v1158 = vpop.f32.mrb[0].mxu0
          %v1159 = vadd.f32 0.0, %v1158
          %v1160 = vpop.f32.mrb[0].mxu0
          %1161 = vmatprep.mubr.bf16.mxu0 0
          %1162 = vmatmul.mubr.bf16.gmra.mrb[0].mxu0 %v1030
          %v1163 = vpop.f32.mrb[0].mxu0
          %v1164 = vadd.f32 0.0, %v1163
          %v1165 = vpop.f32.mrb[0].mxu0
          %v1166 = vpop.f32.mrb[0].mxu0
          %v1167 = vadd.f32 0.0, %v1166
          %v1168 = vpop.f32.mrb[0].mxu0
          %1169 = vmatprep.mubr.bf16.mxu0 0
          %1170 = vmatmul.mubr.bf16.gmra.mrb[0].mxu0 %v1031
          %v1171 = vpop.f32.mrb[0].mxu0
          %v1172 = vadd.f32 0.0, %v1171
          %v1173 = vpop.f32.mrb[0].mxu0
          %v1174 = vpop.f32.mrb[0].mxu0
          %v1175 = vadd.f32 0.0, %v1174
          %v1176 = vpop.f32.mrb[0].mxu0
          %1177 = vmatprep.mubr.bf16.mxu0 0
          %1178 = vmatmul.mubr.bf16.gmra.mrb[0].mxu0 %v1032
          %v1179 = vpop.f32.mrb[0].mxu0
          %v1180 = vadd.f32 0.0, %v1179
          %v1181 = vpop.f32.mrb[0].mxu0
          %v1182 = vpop.f32.mrb[0].mxu0
          %v1183 = vadd.f32 0.0, %v1182
          %v1184 = vpop.f32.mrb[0].mxu0
          %1185 = vdwg.mxu0
          %v1202 = vunpack.c.l.b16 %v945
          %v1203 = vunpack.c.l.b16 %v946
          %v1204 = vunpack.c.l.b16 %v947
          %v1205 = vunpack.c.l.b16 %v948
          %v1206 = vunpack.c.l.b16 %v949
          %v1207 = vunpack.c.l.b16 %v950
          %v1208 = vunpack.c.l.b16 %v951
          %v1209 = vunpack.c.l.b16 %v952
          %v1210 = vunpack.c.l.b16 %v953
          %v1211 = vunpack.c.l.b16 %v954
          %v1212 = vunpack.c.l.b16 %v955
          %v1213 = vunpack.c.l.b16 %v956
          %v1214 = vunpack.c.l.b16 %v957
          %v1215 = vunpack.c.l.b16 %v958
          %v1216 = vunpack.c.l.b16 %v959
          %v1217 = vunpack.c.l.b16 %v960
          %v1218 = vpack.c.b16 %v1203, %v1202
          %v1219 = vpack.c.b16 %v1205, %v1204
          %v1220 = vpack.c.b16 %v1207, %v1206
          %v1221 = vpack.c.b16 %v1209, %v1208
          %v1222 = vpack.c.b16 %v1211, %v1210
          %v1223 = vpack.c.b16 %v1213, %v1212
          %v1224 = vpack.c.b16 %v1215, %v1214
          %v1225 = vpack.c.b16 %v1217, %v1216
          %1234 = vmatprep.subr.bf16.mxu0 0
          %1235 = vmatpush1.bf16.msra.mxu0 %v1218
          %1236 = vmatprep.subr.bf16.mxu0 0
          %1237 = vmatpush1.bf16.msra.mxu0 %v1219
          %1238 = vmatprep.subr.bf16.mxu0 0
          %1239 = vmatpush1.bf16.msra.mxu0 %v1220
          %1240 = vmatprep.subr.bf16.mxu0 0
          %1241 = vmatpush1.bf16.msra.mxu0 %v1221
          %1242 = vmatprep.subr.bf16.mxu0 0
          %1243 = vmatpush1.bf16.msra.mxu0 %v1222
          %1244 = vmatprep.subr.bf16.mxu0 0
          %1245 = vmatpush1.bf16.msra.mxu0 %v1223
          %1246 = vmatprep.subr.bf16.mxu0 0
          %1247 = vmatpush1.bf16.msra.mxu0 %v1224
          %1248 = vmatprep.subr.bf16.mxu0 0
          %1249 = vmatpush1.bf16.msra.mxu0 %v1225
          %1250 = vmatprep.subr.bf16.mxu0 0
          %1251 = vmatpush1.bf16.msra.mxu0 0
          %1252 = vmatprep.subr.bf16.mxu0 0
          %1253 = vmatpush1.bf16.msra.mxu0 0
          %1254 = vmatprep.subr.bf16.mxu0 0
          %1255 = vmatpush1.bf16.msra.mxu0 0
          %1256 = vmatprep.subr.bf16.mxu0 0
          %1257 = vmatpush1.bf16.msra.mxu0 0
          %1258 = vmatprep.subr.bf16.mxu0 0
          %1259 = vmatpush1.bf16.msra.mxu0 0
          %1260 = vmatprep.subr.bf16.mxu0 0
          %1261 = vmatpush1.bf16.msra.mxu0 0
          %1262 = vmatprep.subr.bf16.mxu0 0
          %1263 = vmatpush1.bf16.msra.mxu0 0
          %1264 = vmatprep.subr.bf16.mxu0 0
          %1265 = vmatpush1.bf16.msra.mxu0 0
          %1266 = vmatprep.mubr.bf16.mxu0 0
          %1267 = vmatmul.mubr.bf16.gmra.mrb[0].mxu0 %v937
          %v1268 = vpop.f32.mrb[0].mxu0
          %v1269 = vadd.f32 %v1124, %v1268
          %v1270 = vpop.f32.mrb[0].mxu0
          %v1271 = vpop.f32.mrb[0].mxu0
          %v1272 = vadd.f32 %v1127, %v1271
          %v1273 = vpop.f32.mrb[0].mxu0
          %1274 = vmatprep.mubr.bf16.mxu0 0
          %1275 = vmatmul.mubr.bf16.gmra.mrb[0].mxu0 %v938
          %v1276 = vpop.f32.mrb[0].mxu0
          %v1277 = vadd.f32 %v1132, %v1276
          %v1278 = vpop.f32.mrb[0].mxu0
          %v1279 = vpop.f32.mrb[0].mxu0
          %v1280 = vadd.f32 %v1135, %v1279
          %v1281 = vpop.f32.mrb[0].mxu0
          %1282 = vmatprep.mubr.bf16.mxu0 0
          %1283 = vmatmul.mubr.bf16.gmra.mrb[0].mxu0 %v939
          %v1284 = vpop.f32.mrb[0].mxu0
          %v1285 = vadd.f32 %v1140, %v1284
          %v1286 = vpop.f32.mrb[0].mxu0
          %v1287 = vpop.f32.mrb[0].mxu0
          %v1288 = vadd.f32 %v1143, %v1287
          %v1289 = vpop.f32.mrb[0].mxu0
          %1290 = vmatprep.mubr.bf16.mxu0 0
          %1291 = vmatmul.mubr.bf16.gmra.mrb[0].mxu0 %v940
          %v1292 = vpop.f32.mrb[0].mxu0
          %v1293 = vadd.f32 %v1148, %v1292
          %v1294 = vpop.f32.mrb[0].mxu0
          %v1295 = vpop.f32.mrb[0].mxu0
          %v1296 = vadd.f32 %v1151, %v1295
          %v1297 = vpop.f32.mrb[0].mxu0
          %1298 = vmatprep.mubr.bf16.mxu0 0
          %1299 = vmatmul.mubr.bf16.gmra.mrb[0].mxu0 %v941
          %v1300 = vpop.f32.mrb[0].mxu0
          %v1301 = vadd.f32 %v1156, %v1300
          %v1302 = vpop.f32.mrb[0].mxu0
          %v1303 = vpop.f32.mrb[0].mxu0
          %v1304 = vadd.f32 %v1159, %v1303
          %v1305 = vpop.f32.mrb[0].mxu0
          %1306 = vmatprep.mubr.bf16.mxu0 0
          %1307 = vmatmul.mubr.bf16.gmra.mrb[0].mxu0 %v942
          %v1308 = vpop.f32.mrb[0].mxu0
          %v1309 = vadd.f32 %v1164, %v1308
          %v1310 = vpop.f32.mrb[0].mxu0
          %v1311 = vpop.f32.mrb[0].mxu0
          %v1312 = vadd.f32 %v1167, %v1311
          %v1313 = vpop.f32.mrb[0].mxu0
          %1314 = vmatprep.mubr.bf16.mxu0 0
          %1315 = vmatmul.mubr.bf16.gmra.mrb[0].mxu0 %v943
          %v1316 = vpop.f32.mrb[0].mxu0
          %v1317 = vadd.f32 %v1172, %v1316
          %v1318 = vpop.f32.mrb[0].mxu0
          %v1319 = vpop.f32.mrb[0].mxu0
          %v1320 = vadd.f32 %v1175, %v1319
          %v1321 = vpop.f32.mrb[0].mxu0
          %1322 = vmatprep.mubr.bf16.mxu0 0
          %1323 = vmatmul.mubr.bf16.gmra.mrb[0].mxu0 %v944
          %v1324 = vpop.f32.mrb[0].mxu0
          %v1325 = vadd.f32 %v1180, %v1324
          %v1326 = vpop.f32.mrb[0].mxu0
          %v1327 = vpop.f32.mrb[0].mxu0
          %v1328 = vadd.f32 %v1183, %v1327
          %v1329 = vpop.f32.mrb[0].mxu0
          %1330 = vdwg.mxu0
          %v1331 = vld [vmem:[%s8] sm:$0x1]
          %v1333 = vlaneseq
          %v1334 = vshrl.u32 %v1333, 7
          %v1335 = vsub.s32 0, %v1334
          %v1336 = vrot.slane %v1331, %v1335
          %v1338 = vadd.f32 %v1269, %v1336
          %v1339 = vadd.f32 %v1272, %v1336
          %v1340 = vadd.f32 %v1277, %v1336
          %v1341 = vadd.f32 %v1280, %v1336
          %v1342 = vadd.f32 %v1285, %v1336
          %v1343 = vadd.f32 %v1288, %v1336
          %v1344 = vadd.f32 %v1293, %v1336
          %v1345 = vadd.f32 %v1296, %v1336
          %v1346 = vadd.f32 %v1301, %v1336
          %v1347 = vadd.f32 %v1304, %v1336
          %v1348 = vadd.f32 %v1309, %v1336
          %v1349 = vadd.f32 %v1312, %v1336
          %v1350 = vadd.f32 %v1317, %v1336
          %v1351 = vadd.f32 %v1320, %v1336
          %v1352 = vadd.f32 %v1325, %v1336
          %v1353 = vadd.f32 %v1328, %v1336
          %v1354 = vmax.f32 %v1338, 0.0
          %v1355 = vmax.f32 %v1339, 0.0
          %v1356 = vmax.f32 %v1340, 0.0
          %v1357 = vmax.f32 %v1341, 0.0
          %v1358 = vmax.f32 %v1342, 0.0
          %v1359 = vmax.f32 %v1343, 0.0
          %v1360 = vmax.f32 %v1344, 0.0
          %v1361 = vmax.f32 %v1345, 0.0
          %v1362 = vmax.f32 %v1346, 0.0
          %v1363 = vmax.f32 %v1347, 0.0
          %v1364 = vmax.f32 %v1348, 0.0
          %v1365 = vmax.f32 %v1349, 0.0
          %v1366 = vmax.f32 %v1350, 0.0
          %v1367 = vmax.f32 %v1351, 0.0
          %v1368 = vmax.f32 %v1352, 0.0
          %v1369 = vmax.f32 %v1353, 0.0
          %s1370 = smul.u32 %s27, 128
          %v1371 = vpack.c.bf16 %v1355, %v1354
          %v1372 = vpack.c.bf16 %v1357, %v1356
          %v1373 = vpack.c.bf16 %v1359, %v1358
          %v1374 = vpack.c.bf16 %v1361, %v1360
          %v1375 = vpack.c.bf16 %v1363, %v1362
          %v1376 = vpack.c.bf16 %v1365, %v1364
          %v1377 = vpack.c.bf16 %v1367, %v1366
          %v1378 = vpack.c.bf16 %v1369, %v1368
          %s1379 = sshra.s32 %s1370, 4
          %s1380 = sand.u32 %s1370, 15
          %s1381 = smul.addr %s1379, 8
          %s1382 = scalar_lea.vmem [#allocation4], %s1381
          %1383 = vst [vmem:[%s1382] sm:$0xff] %v1371
          %1384 = vst [vmem:[%s1382 + $0x8] sm:$0xff] %v1372
          %1385 = vst [vmem:[%s1382 + $0x10] sm:$0xff] %v1373
          %1386 = vst [vmem:[%s1382 + $0x18] sm:$0xff] %v1374
          %1387 = vst [vmem:[%s1382 + $0x20] sm:$0xff] %v1375
          %1388 = vst [vmem:[%s1382 + $0x28] sm:$0xff] %v1376
          %1389 = vst [vmem:[%s1382 + $0x30] sm:$0xff] %v1377
          %1390 = vst [vmem:[%s1382 + $0x38] sm:$0xff] %v1378
        $region72: #{edge_predictor_forward.1} parent=63 // pred_fallthru
          _
      $region64: #{edge_predictor_forward.1} parent=59 // pred_fallthru
        _
      %p1391 = scmp.eq.s32.totalorder %s26, 1
      // Predicated region
      $region73: #{edge_predictor_forward.1} parent=59 // pred_check
        %p1392 = pneg %p1391
      $region74: #{edge_predictor_forward.1} parent=59 // pred_check_branch
        %1394 = sbr.rel (%p1392) target = $region76
      $region75: #{edge_predictor_forward.1} parent=59 // pred_region
        %p1395 = scmp.eq.s32.totalorder %s28, 0
        // Predicated region
        $region77: #{edge_predictor_forward.1} parent=75 // pred_check
          %p1396 = pneg %p1395
        $region78: #{edge_predictor_forward.1} parent=75 // pred_check_branch
          %1398 = sbr.rel (%p1396) target = $region80
        $region79: #{edge_predictor_forward.1} parent=75 // pred_region
          %1399 = vst [vmem:[#allocation3] sm:$0xff] 0.0
          %1400 = vst [vmem:[#allocation3 + $0x8] sm:$0xff] 0.0
          %1401 = vst [vmem:[#allocation3 + $0x10] sm:$0xff] 0.0
          %1402 = vst [vmem:[#allocation3 + $0x18] sm:$0xff] 0.0
          %1403 = vst [vmem:[#allocation3 + $0x20] sm:$0xff] 0.0
          %1404 = vst [vmem:[#allocation3 + $0x28] sm:$0xff] 0.0
          %1405 = vst [vmem:[#allocation3 + $0x30] sm:$0xff] 0.0
          %1406 = vst [vmem:[#allocation3 + $0x38] sm:$0xff] 0.0
          %1407 = vst [vmem:[#allocation3 + $0x40] sm:$0xff] 0.0
          %1408 = vst [vmem:[#allocation3 + $0x48] sm:$0xff] 0.0
          %1409 = vst [vmem:[#allocation3 + $0x50] sm:$0xff] 0.0
          %1410 = vst [vmem:[#allocation3 + $0x58] sm:$0xff] 0.0
          %1411 = vst [vmem:[#allocation3 + $0x60] sm:$0xff] 0.0
          %1412 = vst [vmem:[#allocation3 + $0x68] sm:$0xff] 0.0
          %1413 = vst [vmem:[#allocation3 + $0x70] sm:$0xff] 0.0
          %1414 = vst [vmem:[#allocation3 + $0x78] sm:$0xff] 0.0
        $region80: #{edge_predictor_forward.1} parent=75 // pred_fallthru
          _
        %s1415 = smul.u32 %s28, 128
        %v1416 = vld [vmem:[#allocation3] sm:$0xff]
        %v1417 = vld [vmem:[#allocation3 + $0x8] sm:$0xff]
        %v1418 = vld [vmem:[#allocation3 + $0x10] sm:$0xff]
        %v1419 = vld [vmem:[#allocation3 + $0x18] sm:$0xff]
        %v1420 = vld [vmem:[#allocation3 + $0x20] sm:$0xff]
        %v1421 = vld [vmem:[#allocation3 + $0x28] sm:$0xff]
        %v1422 = vld [vmem:[#allocation3 + $0x30] sm:$0xff]
        %v1423 = vld [vmem:[#allocation3 + $0x38] sm:$0xff]
        %v1424 = vld [vmem:[#allocation3 + $0x40] sm:$0xff]
        %v1425 = vld [vmem:[#allocation3 + $0x48] sm:$0xff]
        %v1426 = vld [vmem:[#allocation3 + $0x50] sm:$0xff]
        %v1427 = vld [vmem:[#allocation3 + $0x58] sm:$0xff]
        %v1428 = vld [vmem:[#allocation3 + $0x60] sm:$0xff]
        %v1429 = vld [vmem:[#allocation3 + $0x68] sm:$0xff]
        %v1430 = vld [vmem:[#allocation3 + $0x70] sm:$0xff]
        %v1431 = vld [vmem:[#allocation3 + $0x78] sm:$0xff]
        %s1432 = sshra.s32 %s1415, 4
        %s1433 = sand.u32 %s1415, 15
        %s1434 = smul.addr %s1432, 8
        %s1435 = scalar_lea.vmem [#allocation4], %s1434
        %v1436 = vld [vmem:[%s1435] sm:$0xff]
        %v1437 = vld [vmem:[%s1435 + $0x8] sm:$0xff]
        %v1438 = vld [vmem:[%s1435 + $0x10] sm:$0xff]
        %v1439 = vld [vmem:[%s1435 + $0x18] sm:$0xff]
        %v1440 = vld [vmem:[%s1435 + $0x20] sm:$0xff]
        %v1441 = vld [vmem:[%s1435 + $0x28] sm:$0xff]
        %v1442 = vld [vmem:[%s1435 + $0x30] sm:$0xff]
        %v1443 = vld [vmem:[%s1435 + $0x38] sm:$0xff]
        %v1460 = vunpack.c.l.b16 %v493
        %v1461 = vunpack.c.l.b16 %v494
        %v1462 = vunpack.c.l.b16 %v495
        %v1463 = vunpack.c.l.b16 %v496
        %v1464 = vunpack.c.l.b16 %v497
        %v1465 = vunpack.c.l.b16 %v498
        %v1466 = vunpack.c.l.b16 %v499
        %v1467 = vunpack.c.l.b16 %v500
        %v1468 = vunpack.c.l.b16 %v501
        %v1469 = vunpack.c.l.b16 %v502
        %v1470 = vunpack.c.l.b16 %v503
        %v1471 = vunpack.c.l.b16 %v504
        %v1472 = vunpack.c.l.b16 %v505
        %v1473 = vunpack.c.l.b16 %v506
        %v1474 = vunpack.c.l.b16 %v507
        %v1475 = vunpack.c.l.b16 %v508
        %v1476 = vpack.c.b16 %v1461, %v1460
        %v1477 = vpack.c.b16 %v1463, %v1462
        %v1478 = vpack.c.b16 %v1465, %v1464
        %v1479 = vpack.c.b16 %v1467, %v1466
        %v1480 = vpack.c.b16 %v1469, %v1468
        %v1481 = vpack.c.b16 %v1471, %v1470
        %v1482 = vpack.c.b16 %v1473, %v1472
        %v1483 = vpack.c.b16 %v1475, %v1474
        %1492 = vmatprep.subr.bf16.mxu0 0
        %1493 = vmatpush1.bf16.msra.mxu0 %v1436
        %1494 = vmatprep.subr.bf16.mxu0 0
        %1495 = vmatpush1.bf16.msra.mxu0 %v1437
        %1496 = vmatprep.subr.bf16.mxu0 0
        %1497 = vmatpush1.bf16.msra.mxu0 %v1438
        %1498 = vmatprep.subr.bf16.mxu0 0
        %1499 = vmatpush1.bf16.msra.mxu0 %v1439
        %1500 = vmatprep.subr.bf16.mxu0 0
        %1501 = vmatpush1.bf16.msra.mxu0 %v1440
        %1502 = vmatprep.subr.bf16.mxu0 0
        %1503 = vmatpush1.bf16.msra.mxu0 %v1441
        %1504 = vmatprep.subr.bf16.mxu0 0
        %1505 = vmatpush1.bf16.msra.mxu0 %v1442
        %1506 = vmatprep.subr.bf16.mxu0 0
        %1507 = vmatpush1.bf16.msra.mxu0 %v1443
        %1508 = vmatprep.subr.bf16.mxu0 0
        %1509 = vmatpush1.bf16.msra.mxu0 0
        %1510 = vmatprep.subr.bf16.mxu0 0
        %1511 = vmatpush1.bf16.msra.mxu0 0
        %1512 = vmatprep.subr.bf16.mxu0 0
        %1513 = vmatpush1.bf16.msra.mxu0 0
        %1514 = vmatprep.subr.bf16.mxu0 0
        %1515 = vmatpush1.bf16.msra.mxu0 0
        %1516 = vmatprep.subr.bf16.mxu0 0
        %1517 = vmatpush1.bf16.msra.mxu0 0
        %1518 = vmatprep.subr.bf16.mxu0 0
        %1519 = vmatpush1.bf16.msra.mxu0 0
        %1520 = vmatprep.subr.bf16.mxu0 0
        %1521 = vmatpush1.bf16.msra.mxu0 0
        %1522 = vmatprep.subr.bf16.mxu0 0
        %1523 = vmatpush1.bf16.msra.mxu0 0
        %1524 = vmatprep.mubr.bf16.mxu0 0
        %1525 = vmatmul.mubr.bf16.gmra.mrb[0].mxu0 %v1476
        %v1526 = vpop.f32.mrb[0].mxu0
        %v1527 = vadd.f32 0.0, %v1526
        %v1528 = vpop.f32.mrb[0].mxu0
        %v1529 = vpop.f32.mrb[0].mxu0
        %v1530 = vadd.f32 0.0, %v1529
        %v1531 = vpop.f32.mrb[0].mxu0
        %1532 = vmatprep.mubr.bf16.mxu0 0
        %1533 = vmatmul.mubr.bf16.gmra.mrb[0].mxu0 %v1477
        %v1534 = vpop.f32.mrb[0].mxu0
        %v1535 = vadd.f32 0.0, %v1534
        %v1536 = vpop.f32.mrb[0].mxu0
        %v1537 = vpop.f32.mrb[0].mxu0
        %v1538 = vadd.f32 0.0, %v1537
        %v1539 = vpop.f32.mrb[0].mxu0
        %1540 = vmatprep.mubr.bf16.mxu0 0
        %1541 = vmatmul.mubr.bf16.gmra.mrb[0].mxu0 %v1478
        %v1542 = vpop.f32.mrb[0].mxu0
        %v1543 = vadd.f32 0.0, %v1542
        %v1544 = vpop.f32.mrb[0].mxu0
        %v1545 = vpop.f32.mrb[0].mxu0
        %v1546 = vadd.f32 0.0, %v1545
        %v1547 = vpop.f32.mrb[0].mxu0
        %1548 = vmatprep.mubr.bf16.mxu0 0
        %1549 = vmatmul.mubr.bf16.gmra.mrb[0].mxu0 %v1479
        %v1550 = vpop.f32.mrb[0].mxu0
        %v1551 = vadd.f32 0.0, %v1550
        %v1552 = vpop.f32.mrb[0].mxu0
        %v1553 = vpop.f32.mrb[0].mxu0
        %v1554 = vadd.f32 0.0, %v1553
        %v1555 = vpop.f32.mrb[0].mxu0
        %1556 = vmatprep.mubr.bf16.mxu0 0
        %1557 = vmatmul.mubr.bf16.gmra.mrb[0].mxu0 %v1480
        %v1558 = vpop.f32.mrb[0].mxu0
        %v1559 = vadd.f32 0.0, %v1558
        %v1560 = vpop.f32.mrb[0].mxu0
        %v1561 = vpop.f32.mrb[0].mxu0
        %v1562 = vadd.f32 0.0, %v1561
        %v1563 = vpop.f32.mrb[0].mxu0
        %1564 = vmatprep.mubr.bf16.mxu0 0
        %1565 = vmatmul.mubr.bf16.gmra.mrb[0].mxu0 %v1481
        %v1566 = vpop.f32.mrb[0].mxu0
        %v1567 = vadd.f32 0.0, %v1566
        %v1568 = vpop.f32.mrb[0].mxu0
        %v1569 = vpop.f32.mrb[0].mxu0
        %v1570 = vadd.f32 0.0, %v1569
        %v1571 = vpop.f32.mrb[0].mxu0
        %1572 = vmatprep.mubr.bf16.mxu0 0
        %1573 = vmatmul.mubr.bf16.gmra.mrb[0].mxu0 %v1482
        %v1574 = vpop.f32.mrb[0].mxu0
        %v1575 = vadd.f32 0.0, %v1574
        %v1576 = vpop.f32.mrb[0].mxu0
        %v1577 = vpop.f32.mrb[0].mxu0
        %v1578 = vadd.f32 0.0, %v1577
        %v1579 = vpop.f32.mrb[0].mxu0
        %1580 = vmatprep.mubr.bf16.mxu0 0
        %1581 = vmatmul.mubr.bf16.gmra.mrb[0].mxu0 %v1483
        %v1582 = vpop.f32.mrb[0].mxu0
        %v1583 = vadd.f32 0.0, %v1582
        %v1584 = vpop.f32.mrb[0].mxu0
        %v1585 = vpop.f32.mrb[0].mxu0
        %v1586 = vadd.f32 0.0, %v1585
        %v1587 = vpop.f32.mrb[0].mxu0
        %1588 = vdwg.mxu0
        %v1589 = vadd.f32 %v1416, %v1527
        %v1590 = vadd.f32 %v1417, %v1530
        %v1591 = vadd.f32 %v1418, %v1535
        %v1592 = vadd.f32 %v1419, %v1538
        %v1593 = vadd.f32 %v1420, %v1543
        %v1594 = vadd.f32 %v1421, %v1546
        %v1595 = vadd.f32 %v1422, %v1551
        %v1596 = vadd.f32 %v1423, %v1554
        %v1597 = vadd.f32 %v1424, %v1559
        %v1598 = vadd.f32 %v1425, %v1562
        %v1599 = vadd.f32 %v1426, %v1567
        %v1600 = vadd.f32 %v1427, %v1570
        %v1601 = vadd.f32 %v1428, %v1575
        %v1602 = vadd.f32 %v1429, %v1578
        %v1603 = vadd.f32 %v1430, %v1583
        %v1604 = vadd.f32 %v1431, %v1586
        %1605 = vst [vmem:[#allocation3] sm:$0xff] %v1589
        %1606 = vst [vmem:[#allocation3 + $0x8] sm:$0xff] %v1590
        %1607 = vst [vmem:[#allocation3 + $0x10] sm:$0xff] %v1591
        %1608 = vst [vmem:[#allocation3 + $0x18] sm:$0xff] %v1592
        %1609 = vst [vmem:[#allocation3 + $0x20] sm:$0xff] %v1593
        %1610 = vst [vmem:[#allocation3 + $0x28] sm:$0xff] %v1594
        %1611 = vst [vmem:[#allocation3 + $0x30] sm:$0xff] %v1595
        %1612 = vst [vmem:[#allocation3 + $0x38] sm:$0xff] %v1596
        %1613 = vst [vmem:[#allocation3 + $0x40] sm:$0xff] %v1597
        %1614 = vst [vmem:[#allocation3 + $0x48] sm:$0xff] %v1598
        %1615 = vst [vmem:[#allocation3 + $0x50] sm:$0xff] %v1599
        %1616 = vst [vmem:[#allocation3 + $0x58] sm:$0xff] %v1600
        %1617 = vst [vmem:[#allocation3 + $0x60] sm:$0xff] %v1601
        %1618 = vst [vmem:[#allocation3 + $0x68] sm:$0xff] %v1602
        %1619 = vst [vmem:[#allocation3 + $0x70] sm:$0xff] %v1603
        %1620 = vst [vmem:[#allocation3 + $0x78] sm:$0xff] %v1604
        // Predicated region
        $region81: #{edge_predictor_forward.1} parent=75 // pred_check
          %p1621 = pneg %p1395
        $region82: #{edge_predictor_forward.1} parent=75 // pred_check_branch
          %1623 = sbr.rel (%p1621) target = $region84
        $region83: #{edge_predictor_forward.1} parent=75 // pred_region
          %v1624 = vld [vmem:[%s462] sm:$0xff]
          %v1625 = vld [vmem:[%s462 + $0x8] sm:$0xff]
          %v1626 = vld [vmem:[%s462 + $0x10] sm:$0xff]
          %v1627 = vld [vmem:[%s462 + $0x18] sm:$0xff]
          %v1628 = vld [vmem:[%s462 + $0x20] sm:$0xff]
          %v1629 = vld [vmem:[%s462 + $0x28] sm:$0xff]
          %v1630 = vld [vmem:[%s462 + $0x30] sm:$0xff]
          %v1631 = vld [vmem:[%s462 + $0x38] sm:$0xff]
          %v1632 = vld [vmem:[%s462 + $0x40] sm:$0xff]
          %v1633 = vld [vmem:[%s462 + $0x48] sm:$0xff]
          %v1634 = vld [vmem:[%s462 + $0x50] sm:$0xff]
          %v1635 = vld [vmem:[%s462 + $0x58] sm:$0xff]
          %v1636 = vld [vmem:[%s462 + $0x60] sm:$0xff]
          %v1637 = vld [vmem:[%s462 + $0x68] sm:$0xff]
          %v1638 = vld [vmem:[%s462 + $0x70] sm:$0xff]
          %v1639 = vld [vmem:[%s462 + $0x78] sm:$0xff]
          %v1640 = vrcp.pop %v1624
          %v1641 = vrcp.pop %v1625
          %v1642 = vrcp.pop %v1626
          %v1643 = vrcp.pop %v1627
          %v1644 = vrcp.pop %v1628
          %v1645 = vrcp.pop %v1629
          %v1646 = vrcp.pop %v1630
          %v1647 = vrcp.pop %v1631
          %v1648 = vrcp.pop %v1632
          %v1649 = vrcp.pop %v1633
          %v1650 = vrcp.pop %v1634
          %v1651 = vrcp.pop %v1635
          %v1652 = vrcp.pop %v1636
          %v1653 = vrcp.pop %v1637
          %v1654 = vrcp.pop %v1638
          %v1655 = vrcp.pop %v1639
          %v1656 = vld [vmem:[#allocation3] sm:$0xff]
          %v1657 = vld [vmem:[#allocation3 + $0x8] sm:$0xff]
          %v1658 = vld [vmem:[#allocation3 + $0x10] sm:$0xff]
          %v1659 = vld [vmem:[#allocation3 + $0x18] sm:$0xff]
          %v1660 = vld [vmem:[#allocation3 + $0x20] sm:$0xff]
          %v1661 = vld [vmem:[#allocation3 + $0x28] sm:$0xff]
          %v1662 = vld [vmem:[#allocation3 + $0x30] sm:$0xff]
          %v1663 = vld [vmem:[#allocation3 + $0x38] sm:$0xff]
          %v1664 = vld [vmem:[#allocation3 + $0x40] sm:$0xff]
          %v1665 = vld [vmem:[#allocation3 + $0x48] sm:$0xff]
          %v1666 = vld [vmem:[#allocation3 + $0x50] sm:$0xff]
          %v1667 = vld [vmem:[#allocation3 + $0x58] sm:$0xff]
          %v1668 = vld [vmem:[#allocation3 + $0x60] sm:$0xff]
          %v1669 = vld [vmem:[#allocation3 + $0x68] sm:$0xff]
          %v1670 = vld [vmem:[#allocation3 + $0x70] sm:$0xff]
          %v1671 = vld [vmem:[#allocation3 + $0x78] sm:$0xff]
          %1673 = vset.pattern.permute.xlu0 0
          %1674 = vperm.xlu0 %1673, %v1640
          %v1675 = vpop.permute.xlu0 %1674
          %1678 = vset.pattern.permute.xlu0 0
          %1679 = vperm.xlu0 %1678, %v1641
          %v1680 = vpop.permute.xlu0 %1679
          %1683 = vset.pattern.permute.xlu0 0
          %1684 = vperm.xlu0 %1683, %v1642
          %v1685 = vpop.permute.xlu0 %1684
          %1688 = vset.pattern.permute.xlu0 0
          %1689 = vperm.xlu0 %1688, %v1643
          %v1690 = vpop.permute.xlu0 %1689
          %1693 = vset.pattern.permute.xlu0 0
          %1694 = vperm.xlu0 %1693, %v1644
          %v1695 = vpop.permute.xlu0 %1694
          %1698 = vset.pattern.permute.xlu0 0
          %1699 = vperm.xlu0 %1698, %v1645
          %v1700 = vpop.permute.xlu0 %1699
          %1703 = vset.pattern.permute.xlu0 0
          %1704 = vperm.xlu0 %1703, %v1646
          %v1705 = vpop.permute.xlu0 %1704
          %1708 = vset.pattern.permute.xlu0 0
          %1709 = vperm.xlu0 %1708, %v1647
          %v1710 = vpop.permute.xlu0 %1709
          %1713 = vset.pattern.permute.xlu0 0
          %1714 = vperm.xlu0 %1713, %v1648
          %v1715 = vpop.permute.xlu0 %1714
          %1718 = vset.pattern.permute.xlu0 0
          %1719 = vperm.xlu0 %1718, %v1649
          %v1720 = vpop.permute.xlu0 %1719
          %1723 = vset.pattern.permute.xlu0 0
          %1724 = vperm.xlu0 %1723, %v1650
          %v1725 = vpop.permute.xlu0 %1724
          %1728 = vset.pattern.permute.xlu0 0
          %1729 = vperm.xlu0 %1728, %v1651
          %v1730 = vpop.permute.xlu0 %1729
          %1733 = vset.pattern.permute.xlu0 0
          %1734 = vperm.xlu0 %1733, %v1652
          %v1735 = vpop.permute.xlu0 %1734
          %1738 = vset.pattern.permute.xlu0 0
          %1739 = vperm.xlu0 %1738, %v1653
          %v1740 = vpop.permute.xlu0 %1739
          %1743 = vset.pattern.permute.xlu0 0
          %1744 = vperm.xlu0 %1743, %v1654
          %v1745 = vpop.permute.xlu0 %1744
          %1748 = vset.pattern.permute.xlu0 0
          %1749 = vperm.xlu0 %1748, %v1655
          %v1750 = vpop.permute.xlu0 %1749
          %v1752 = vmul.f32 %v1656, %v1675
          %v1753 = vmul.f32 %v1657, %v1680
          %v1754 = vmul.f32 %v1658, %v1685
          %v1755 = vmul.f32 %v1659, %v1690
          %v1756 = vmul.f32 %v1660, %v1695
          %v1757 = vmul.f32 %v1661, %v1700
          %v1758 = vmul.f32 %v1662, %v1705
          %v1759 = vmul.f32 %v1663, %v1710
          %v1760 = vmul.f32 %v1664, %v1715
          %v1761 = vmul.f32 %v1665, %v1720
          %v1762 = vmul.f32 %v1666, %v1725
          %v1763 = vmul.f32 %v1667, %v1730
          %v1764 = vmul.f32 %v1668, %v1735
          %v1765 = vmul.f32 %v1669, %v1740
          %v1766 = vmul.f32 %v1670, %v1745
          %v1767 = vmul.f32 %v1671, %v1750
          %v1768 = vpack.c.bf16 %v1753, %v1752
          %v1769 = vpack.c.bf16 %v1755, %v1754
          %v1770 = vpack.c.bf16 %v1757, %v1756
          %v1771 = vpack.c.bf16 %v1759, %v1758
          %v1772 = vpack.c.bf16 %v1761, %v1760
          %v1773 = vpack.c.bf16 %v1763, %v1762
          %v1774 = vpack.c.bf16 %v1765, %v1764
          %v1775 = vpack.c.bf16 %v1767, %v1766
          %v1776 = vld [vmem:[%s6] sm:$0xf]
          %v1777 = vld [vmem:[%s6 + $0x4] sm:$0xf]
          %v1778 = vld [vmem:[%s6 + $0x8] sm:$0xf]
          %v1779 = vld [vmem:[%s6 + $0xc] sm:$0xf]
          %v1780 = vld [vmem:[%s6 + $0x10] sm:$0xf]
          %v1781 = vld [vmem:[%s6 + $0x14] sm:$0xf]
          %v1782 = vld [vmem:[%s6 + $0x18] sm:$0xf]
          %v1783 = vld [vmem:[%s6 + $0x1c] sm:$0xf]
          %v1784 = vld [vmem:[%s6 + $0x20] sm:$0xf]
          %v1785 = vld [vmem:[%s6 + $0x24] sm:$0xf]
          %v1786 = vld [vmem:[%s6 + $0x28] sm:$0xf]
          %v1787 = vld [vmem:[%s6 + $0x2c] sm:$0xf]
          %v1788 = vld [vmem:[%s6 + $0x30] sm:$0xf]
          %v1789 = vld [vmem:[%s6 + $0x34] sm:$0xf]
          %v1790 = vld [vmem:[%s6 + $0x38] sm:$0xf]
          %v1791 = vld [vmem:[%s6 + $0x3c] sm:$0xf]
          %s1792 = smul.u32 %s27, 128
          %s1793 = sshra.s32 %s1792, 4
          %s1794 = sand.u32 %s1792, 15
          %s1795 = smul.addr %s1793, 8
          %s1796 = scalar_lea.vmem [#allocation4], %s1795
          %v1797 = vld [vmem:[%s1796] sm:$0xff]
          %v1798 = vld [vmem:[%s1796 + $0x8] sm:$0xff]
          %v1799 = vld [vmem:[%s1796 + $0x10] sm:$0xff]
          %v1800 = vld [vmem:[%s1796 + $0x18] sm:$0xff]
          %v1801 = vld [vmem:[%s1796 + $0x20] sm:$0xff]
          %v1802 = vld [vmem:[%s1796 + $0x28] sm:$0xff]
          %v1803 = vld [vmem:[%s1796 + $0x30] sm:$0xff]
          %v1804 = vld [vmem:[%s1796 + $0x38] sm:$0xff]
          %v1805 = vld [vmem:[%s7] sm:$0xf]
          %v1806 = vld [vmem:[%s7 + $0x4] sm:$0xf]
          %v1807 = vld [vmem:[%s7 + $0x8] sm:$0xf]
          %v1808 = vld [vmem:[%s7 + $0xc] sm:$0xf]
          %v1809 = vld [vmem:[%s7 + $0x10] sm:$0xf]
          %v1810 = vld [vmem:[%s7 + $0x14] sm:$0xf]
          %v1811 = vld [vmem:[%s7 + $0x18] sm:$0xf]
          %v1812 = vld [vmem:[%s7 + $0x1c] sm:$0xf]
          %v1813 = vld [vmem:[%s7 + $0x20] sm:$0xf]
          %v1814 = vld [vmem:[%s7 + $0x24] sm:$0xf]
          %v1815 = vld [vmem:[%s7 + $0x28] sm:$0xf]
          %v1816 = vld [vmem:[%s7 + $0x2c] sm:$0xf]
          %v1817 = vld [vmem:[%s7 + $0x30] sm:$0xf]
          %v1818 = vld [vmem:[%s7 + $0x34] sm:$0xf]
          %v1819 = vld [vmem:[%s7 + $0x38] sm:$0xf]
          %v1820 = vld [vmem:[%s7 + $0x3c] sm:$0xf]
          %v1837 = vunpack.c.l.b16 %v1805
          %v1838 = vunpack.c.l.b16 %v1806
          %v1839 = vunpack.c.l.b16 %v1807
          %v1840 = vunpack.c.l.b16 %v1808
          %v1841 = vunpack.c.l.b16 %v1809
          %v1842 = vunpack.c.l.b16 %v1810
          %v1843 = vunpack.c.l.b16 %v1811
          %v1844 = vunpack.c.l.b16 %v1812
          %v1845 = vunpack.c.l.b16 %v1813
          %v1846 = vunpack.c.l.b16 %v1814
          %v1847 = vunpack.c.l.b16 %v1815
          %v1848 = vunpack.c.l.b16 %v1816
          %v1849 = vunpack.c.l.b16 %v1817
          %v1850 = vunpack.c.l.b16 %v1818
          %v1851 = vunpack.c.l.b16 %v1819
          %v1852 = vunpack.c.l.b16 %v1820
          %v1853 = vpack.c.b16 %v1838, %v1837
          %v1854 = vpack.c.b16 %v1840, %v1839
          %v1855 = vpack.c.b16 %v1842, %v1841
          %v1856 = vpack.c.b16 %v1844, %v1843
          %v1857 = vpack.c.b16 %v1846, %v1845
          %v1858 = vpack.c.b16 %v1848, %v1847
          %v1859 = vpack.c.b16 %v1850, %v1849
          %v1860 = vpack.c.b16 %v1852, %v1851
          %1869 = vmatprep.subr.bf16.mxu0 0
          %1870 = vmatpush1.bf16.msra.mxu0 %v1853
          %1871 = vmatprep.subr.bf16.mxu0 0
          %1872 = vmatpush1.bf16.msra.mxu0 %v1854
          %1873 = vmatprep.subr.bf16.mxu0 0
          %1874 = vmatpush1.bf16.msra.mxu0 %v1855
          %1875 = vmatprep.subr.bf16.mxu0 0
          %1876 = vmatpush1.bf16.msra.mxu0 %v1856
          %1877 = vmatprep.subr.bf16.mxu0 0
          %1878 = vmatpush1.bf16.msra.mxu0 %v1857
          %1879 = vmatprep.subr.bf16.mxu0 0
          %1880 = vmatpush1.bf16.msra.mxu0 %v1858
          %1881 = vmatprep.subr.bf16.mxu0 0
          %1882 = vmatpush1.bf16.msra.mxu0 %v1859
          %1883 = vmatprep.subr.bf16.mxu0 0
          %1884 = vmatpush1.bf16.msra.mxu0 %v1860
          %1885 = vmatprep.subr.bf16.mxu0 0
          %1886 = vmatpush1.bf16.msra.mxu0 0
          %1887 = vmatprep.subr.bf16.mxu0 0
          %1888 = vmatpush1.bf16.msra.mxu0 0
          %1889 = vmatprep.subr.bf16.mxu0 0
          %1890 = vmatpush1.bf16.msra.mxu0 0
          %1891 = vmatprep.subr.bf16.mxu0 0
          %1892 = vmatpush1.bf16.msra.mxu0 0
          %1893 = vmatprep.subr.bf16.mxu0 0
          %1894 = vmatpush1.bf16.msra.mxu0 0
          %1895 = vmatprep.subr.bf16.mxu0 0
          %1896 = vmatpush1.bf16.msra.mxu0 0
          %1897 = vmatprep.subr.bf16.mxu0 0
          %1898 = vmatpush1.bf16.msra.mxu0 0
          %1899 = vmatprep.subr.bf16.mxu0 0
          %1900 = vmatpush1.bf16.msra.mxu0 0
          %1901 = vmatprep.mubr.bf16.mxu0 0
          %1902 = vmatmul.mubr.bf16.gmra.mrb[0].mxu0 %v1797
          %v1903 = vpop.f32.mrb[0].mxu0
          %v1904 = vadd.f32 0.0, %v1903
          %v1905 = vpop.f32.mrb[0].mxu0
          %v1906 = vpop.f32.mrb[0].mxu0
          %v1907 = vadd.f32 0.0, %v1906
          %v1908 = vpop.f32.mrb[0].mxu0
          %1909 = vmatprep.mubr.bf16.mxu0 0
          %1910 = vmatmul.mubr.bf16.gmra.mrb[0].mxu0 %v1798
          %v1911 = vpop.f32.mrb[0].mxu0
          %v1912 = vadd.f32 0.0, %v1911
          %v1913 = vpop.f32.mrb[0].mxu0
          %v1914 = vpop.f32.mrb[0].mxu0
          %v1915 = vadd.f32 0.0, %v1914
          %v1916 = vpop.f32.mrb[0].mxu0
          %1917 = vmatprep.mubr.bf16.mxu0 0
          %1918 = vmatmul.mubr.bf16.gmra.mrb[0].mxu0 %v1799
          %v1919 = vpop.f32.mrb[0].mxu0
          %v1920 = vadd.f32 0.0, %v1919
          %v1921 = vpop.f32.mrb[0].mxu0
          %v1922 = vpop.f32.mrb[0].mxu0
          %v1923 = vadd.f32 0.0, %v1922
          %v1924 = vpop.f32.mrb[0].mxu0
          %1925 = vmatprep.mubr.bf16.mxu0 0
          %1926 = vmatmul.mubr.bf16.gmra.mrb[0].mxu0 %v1800
          %v1927 = vpop.f32.mrb[0].mxu0
          %v1928 = vadd.f32 0.0, %v1927
          %v1929 = vpop.f32.mrb[0].mxu0
          %v1930 = vpop.f32.mrb[0].mxu0
          %v1931 = vadd.f32 0.0, %v1930
          %v1932 = vpop.f32.mrb[0].mxu0
          %1933 = vmatprep.mubr.bf16.mxu0 0
          %1934 = vmatmul.mubr.bf16.gmra.mrb[0].mxu0 %v1801
          %v1935 = vpop.f32.mrb[0].mxu0
          %v1936 = vadd.f32 0.0, %v1935
          %v1937 = vpop.f32.mrb[0].mxu0
          %v1938 = vpop.f32.mrb[0].mxu0
          %v1939 = vadd.f32 0.0, %v1938
          %v1940 = vpop.f32.mrb[0].mxu0
          %1941 = vmatprep.mubr.bf16.mxu0 0
          %1942 = vmatmul.mubr.bf16.gmra.mrb[0].mxu0 %v1802
          %v1943 = vpop.f32.mrb[0].mxu0
          %v1944 = vadd.f32 0.0, %v1943
          %v1945 = vpop.f32.mrb[0].mxu0
          %v1946 = vpop.f32.mrb[0].mxu0
          %v1947 = vadd.f32 0.0, %v1946
          %v1948 = vpop.f32.mrb[0].mxu0
          %1949 = vmatprep.mubr.bf16.mxu0 0
          %1950 = vmatmul.mubr.bf16.gmra.mrb[0].mxu0 %v1803
          %v1951 = vpop.f32.mrb[0].mxu0
          %v1952 = vadd.f32 0.0, %v1951
          %v1953 = vpop.f32.mrb[0].mxu0
          %v1954 = vpop.f32.mrb[0].mxu0
          %v1955 = vadd.f32 0.0, %v1954
          %v1956 = vpop.f32.mrb[0].mxu0
          %1957 = vmatprep.mubr.bf16.mxu0 0
          %1958 = vmatmul.mubr.bf16.gmra.mrb[0].mxu0 %v1804
          %v1959 = vpop.f32.mrb[0].mxu0
          %v1960 = vadd.f32 0.0, %v1959
          %v1961 = vpop.f32.mrb[0].mxu0
          %v1962 = vpop.f32.mrb[0].mxu0
          %v1963 = vadd.f32 0.0, %v1962
          %v1964 = vpop.f32.mrb[0].mxu0
          %1965 = vdwg.mxu0
          %v1982 = vunpack.c.l.b16 %v1776
          %v1983 = vunpack.c.l.b16 %v1777
          %v1984 = vunpack.c.l.b16 %v1778
          %v1985 = vunpack.c.l.b16 %v1779
          %v1986 = vunpack.c.l.b16 %v1780
          %v1987 = vunpack.c.l.b16 %v1781
          %v1988 = vunpack.c.l.b16 %v1782
          %v1989 = vunpack.c.l.b16 %v1783
          %v1990 = vunpack.c.l.b16 %v1784
          %v1991 = vunpack.c.l.b16 %v1785
          %v1992 = vunpack.c.l.b16 %v1786
          %v1993 = vunpack.c.l.b16 %v1787
          %v1994 = vunpack.c.l.b16 %v1788
          %v1995 = vunpack.c.l.b16 %v1789
          %v1996 = vunpack.c.l.b16 %v1790
          %v1997 = vunpack.c.l.b16 %v1791
          %v1998 = vpack.c.b16 %v1983, %v1982
          %v1999 = vpack.c.b16 %v1985, %v1984
          %v2000 = vpack.c.b16 %v1987, %v1986
          %v2001 = vpack.c.b16 %v1989, %v1988
          %v2002 = vpack.c.b16 %v1991, %v1990
          %v2003 = vpack.c.b16 %v1993, %v1992
          %v2004 = vpack.c.b16 %v1995, %v1994
          %v2005 = vpack.c.b16 %v1997, %v1996
          %2014 = vmatprep.subr.bf16.mxu0 0
          %2015 = vmatpush1.bf16.msra.mxu0 %v1998
          %2016 = vmatprep.subr.bf16.mxu0 0
          %2017 = vmatpush1.bf16.msra.mxu0 %v1999
          %2018 = vmatprep.subr.bf16.mxu0 0
          %2019 = vmatpush1.bf16.msra.mxu0 %v2000
          %2020 = vmatprep.subr.bf16.mxu0 0
          %2021 = vmatpush1.bf16.msra.mxu0 %v2001
          %2022 = vmatprep.subr.bf16.mxu0 0
          %2023 = vmatpush1.bf16.msra.mxu0 %v2002
          %2024 = vmatprep.subr.bf16.mxu0 0
          %2025 = vmatpush1.bf16.msra.mxu0 %v2003
          %2026 = vmatprep.subr.bf16.mxu0 0
          %2027 = vmatpush1.bf16.msra.mxu0 %v2004
          %2028 = vmatprep.subr.bf16.mxu0 0
          %2029 = vmatpush1.bf16.msra.mxu0 %v2005
          %2030 = vmatprep.subr.bf16.mxu0 0
          %2031 = vmatpush1.bf16.msra.mxu0 0
          %2032 = vmatprep.subr.bf16.mxu0 0
          %2033 = vmatpush1.bf16.msra.mxu0 0
          %2034 = vmatprep.subr.bf16.mxu0 0
          %2035 = vmatpush1.bf16.msra.mxu0 0
          %2036 = vmatprep.subr.bf16.mxu0 0
          %2037 = vmatpush1.bf16.msra.mxu0 0
          %2038 = vmatprep.subr.bf16.mxu0 0
          %2039 = vmatpush1.bf16.msra.mxu0 0
          %2040 = vmatprep.subr.bf16.mxu0 0
          %2041 = vmatpush1.bf16.msra.mxu0 0
          %2042 = vmatprep.subr.bf16.mxu0 0
          %2043 = vmatpush1.bf16.msra.mxu0 0
          %2044 = vmatprep.subr.bf16.mxu0 0
          %2045 = vmatpush1.bf16.msra.mxu0 0
          %2046 = vmatprep.mubr.bf16.mxu0 0
          %2047 = vmatmul.mubr.bf16.gmra.mrb[0].mxu0 %v1768
          %v2048 = vpop.f32.mrb[0].mxu0
          %v2049 = vadd.f32 %v1904, %v2048
          %v2050 = vpop.f32.mrb[0].mxu0
          %v2051 = vpop.f32.mrb[0].mxu0
          %v2052 = vadd.f32 %v1907, %v2051
          %v2053 = vpop.f32.mrb[0].mxu0
          %2054 = vmatprep.mubr.bf16.mxu0 0
          %2055 = vmatmul.mubr.bf16.gmra.mrb[0].mxu0 %v1769
          %v2056 = vpop.f32.mrb[0].mxu0
          %v2057 = vadd.f32 %v1912, %v2056
          %v2058 = vpop.f32.mrb[0].mxu0
          %v2059 = vpop.f32.mrb[0].mxu0
          %v2060 = vadd.f32 %v1915, %v2059
          %v2061 = vpop.f32.mrb[0].mxu0
          %2062 = vmatprep.mubr.bf16.mxu0 0
          %2063 = vmatmul.mubr.bf16.gmra.mrb[0].mxu0 %v1770
          %v2064 = vpop.f32.mrb[0].mxu0
          %v2065 = vadd.f32 %v1920, %v2064
          %v2066 = vpop.f32.mrb[0].mxu0
          %v2067 = vpop.f32.mrb[0].mxu0
          %v2068 = vadd.f32 %v1923, %v2067
          %v2069 = vpop.f32.mrb[0].mxu0
          %2070 = vmatprep.mubr.bf16.mxu0 0
          %2071 = vmatmul.mubr.bf16.gmra.mrb[0].mxu0 %v1771
          %v2072 = vpop.f32.mrb[0].mxu0
          %v2073 = vadd.f32 %v1928, %v2072
          %v2074 = vpop.f32.mrb[0].mxu0
          %v2075 = vpop.f32.mrb[0].mxu0
          %v2076 = vadd.f32 %v1931, %v2075
          %v2077 = vpop.f32.mrb[0].mxu0
          %2078 = vmatprep.mubr.bf16.mxu0 0
          %2079 = vmatmul.mubr.bf16.gmra.mrb[0].mxu0 %v1772
          %v2080 = vpop.f32.mrb[0].mxu0
          %v2081 = vadd.f32 %v1936, %v2080
          %v2082 = vpop.f32.mrb[0].mxu0
          %v2083 = vpop.f32.mrb[0].mxu0
          %v2084 = vadd.f32 %v1939, %v2083
          %v2085 = vpop.f32.mrb[0].mxu0
          %2086 = vmatprep.mubr.bf16.mxu0 0
          %2087 = vmatmul.mubr.bf16.gmra.mrb[0].mxu0 %v1773
          %v2088 = vpop.f32.mrb[0].mxu0
          %v2089 = vadd.f32 %v1944, %v2088
          %v2090 = vpop.f32.mrb[0].mxu0
          %v2091 = vpop.f32.mrb[0].mxu0
          %v2092 = vadd.f32 %v1947, %v2091
          %v2093 = vpop.f32.mrb[0].mxu0
          %2094 = vmatprep.mubr.bf16.mxu0 0
          %2095 = vmatmul.mubr.bf16.gmra.mrb[0].mxu0 %v1774
          %v2096 = vpop.f32.mrb[0].mxu0
          %v2097 = vadd.f32 %v1952, %v2096
          %v2098 = vpop.f32.mrb[0].mxu0
          %v2099 = vpop.f32.mrb[0].mxu0
          %v2100 = vadd.f32 %v1955, %v2099
          %v2101 = vpop.f32.mrb[0].mxu0
          %2102 = vmatprep.mubr.bf16.mxu0 0
          %2103 = vmatmul.mubr.bf16.gmra.mrb[0].mxu0 %v1775
          %v2104 = vpop.f32.mrb[0].mxu0
          %v2105 = vadd.f32 %v1960, %v2104
          %v2106 = vpop.f32.mrb[0].mxu0
          %v2107 = vpop.f32.mrb[0].mxu0
          %v2108 = vadd.f32 %v1963, %v2107
          %v2109 = vpop.f32.mrb[0].mxu0
          %2110 = vdwg.mxu0
          %v2111 = vld [vmem:[%s9] sm:$0x1]
          %v2113 = vlaneseq
          %v2114 = vshrl.u32 %v2113, 7
          %v2115 = vsub.s32 0, %v2114
          %v2116 = vrot.slane %v2111, %v2115
          %v2118 = vadd.f32 %v2049, %v2116
          %v2119 = vadd.f32 %v2052, %v2116
          %v2120 = vadd.f32 %v2057, %v2116
          %v2121 = vadd.f32 %v2060, %v2116
          %v2122 = vadd.f32 %v2065, %v2116
          %v2123 = vadd.f32 %v2068, %v2116
          %v2124 = vadd.f32 %v2073, %v2116
          %v2125 = vadd.f32 %v2076, %v2116
          %v2126 = vadd.f32 %v2081, %v2116
          %v2127 = vadd.f32 %v2084, %v2116
          %v2128 = vadd.f32 %v2089, %v2116
          %v2129 = vadd.f32 %v2092, %v2116
          %v2130 = vadd.f32 %v2097, %v2116
          %v2131 = vadd.f32 %v2100, %v2116
          %v2132 = vadd.f32 %v2105, %v2116
          %v2133 = vadd.f32 %v2108, %v2116
          %2134 = vst [vmem:[%s489] sm:$0xff] %v2118
          %2135 = vst [vmem:[%s489 + $0x8] sm:$0xff] %v2119
          %2136 = vst [vmem:[%s489 + $0x10] sm:$0xff] %v2120
          %2137 = vst [vmem:[%s489 + $0x18] sm:$0xff] %v2121
          %2138 = vst [vmem:[%s489 + $0x20] sm:$0xff] %v2122
          %2139 = vst [vmem:[%s489 + $0x28] sm:$0xff] %v2123
          %2140 = vst [vmem:[%s489 + $0x30] sm:$0xff] %v2124
          %2141 = vst [vmem:[%s489 + $0x38] sm:$0xff] %v2125
          %2142 = vst [vmem:[%s489 + $0x40] sm:$0xff] %v2126
          %2143 = vst [vmem:[%s489 + $0x48] sm:$0xff] %v2127
          %2144 = vst [vmem:[%s489 + $0x50] sm:$0xff] %v2128
          %2145 = vst [vmem:[%s489 + $0x58] sm:$0xff] %v2129
          %2146 = vst [vmem:[%s489 + $0x60] sm:$0xff] %v2130
          %2147 = vst [vmem:[%s489 + $0x68] sm:$0xff] %v2131
          %2148 = vst [vmem:[%s489 + $0x70] sm:$0xff] %v2132
          %2149 = vst [vmem:[%s489 + $0x78] sm:$0xff] %v2133
        $region84: #{edge_predictor_forward.1} parent=75 // pred_fallthru
          _
      $region76: #{edge_predictor_forward.1} parent=59 // pred_fallthru
        _
      %s2150 = smul.u32 %s27, %s26
      %s2151 = smul.u32 16, %s2150
      %p2152 = scmp.lt.s32.totalorder %s2151, 15
      %s2153 = scalar_select %p2152, %s2151, 15
      %s2154 = smul.addr %s2153, 8
      %s2155 = scalar_lea.vmem %s10, %s2154
      // Predicated region
      $region85: #{edge_predictor_forward.1} parent=59 // pred_check
        %p2156 = pneg %p300
      $region86: #{edge_predictor_forward.1} parent=59 // pred_check_branch
        %2158 = sbr.rel (%p2156) target = $region88
      $region87: #{edge_predictor_forward.1} parent=59 // pred_region
        %s2159 = smul.u32 %s27, %s26
        %s2160 = smul.u32 16, %s2159
      $region88: #{edge_predictor_forward.1} parent=59 // pred_fallthru
        _
    $region60: #{edge_predictor_forward.1} parent=5 // pred_fallthru
      _
    %p2161 = scmp.le.s32.totalorder 2, %s16
    // Predicated region
    $region89: #{edge_predictor_forward.1} parent=5 // pred_check
      %p2162 = pneg %p2161
    $region90: #{edge_predictor_forward.1} parent=5 // pred_check_branch
      %2164 = sbr.rel (%p2162) target = $region92
    $region91: #{edge_predictor_forward.1} parent=5 // pred_region
      %s2165 = ssub.s32 %s16, 2
      // Predicated region
      $region93: #{edge_predictor_forward.1} parent=91 // pred_check
        %p2166 = pneg %p306
      $region94: #{edge_predictor_forward.1} parent=91 // pred_check_branch
        %2168 = sbr.rel (%p2166) target = $region96
      $region95: #{edge_predictor_forward.1} parent=91 // pred_region
        %s2169 = smul.u32 %s30, %s29
        %s2170 = smul.u32 16, %s2169
        %p2171 = scmp.lt.s32.totalorder %s2170, 15
        %s2172 = scalar_select %p2171, %s2170, 15
        %s2173 = smul.addr %s2172, 8
        %s2174 = scalar_lea.vmem %s10, %s2173
      $region96: #{edge_predictor_forward.1} parent=91 // pred_fallthru
        _
    $region92: #{edge_predictor_forward.1} parent=5 // pred_fallthru
      _
  $region6: #{edge_predictor_forward.1} parent=0 // loop_footer
    %s20 = sadd.s32 1, %s16
  $region7: #{edge_predictor_forward.1} parent=0 // loop_footer_branch
    %15 = sbr.rel target = $region3
  $region8: #{edge_predictor_forward.1} parent=0 // loop_exit
    _

</llo_original>
